<compile_context>
chip_gen: v7x
topology: tpu7x:2x2x1
jax: 0.10.0
libtpu: 0.0.40
codegen_flags: <defaults>
</compile_context>

<pallas_src>
import math

import jax
import jax.numpy as jnp
from jax.experimental import pallas as pl
from jax.experimental.pallas import tpu as pltpu

D_MODEL = 64
NHEAD = 2
HEAD_DIM = D_MODEL // NHEAD
D_FF = 256
IN_FEAT = 2
FC1_OUT = 63
FC1_PAD = 64          # pad 63 -> 64 for lane-dense matmul
OUT_PAD = 128         # lane-dense final output slab (real value in column 0)
MAX_LEN = 32
LN_EPS = 1e-5

# rows of the packed (16,128) f32 constant slab
ROW_EMB_B, ROW_BO, ROW_LN1G, ROW_LN1B = 0, 1, 2, 3
ROW_FF2B, ROW_LN2G, ROW_LN2B, ROW_FC1B, ROW_FC2B = 4, 5, 6, 7, 8
SLAB_ROWS = 16


def _layernorm(x, gamma, beta):
    mu = jnp.mean(x, axis=-1, keepdims=True)
    var = jnp.mean((x - mu) ** 2, axis=-1, keepdims=True)
    return (x - mu) * jax.lax.rsqrt(var + LN_EPS) * gamma + beta


def transformer_kernel(x_ref, pe_ref, emb_w_ref,
                       qkv_w_ref, qkv_b_ref, wo_ref,
                       ff1_w_ref, ff1_b_ref, ff2_w_ref,
                       fc1_w_ref, fc2_w_ref, vec_ref,
                       o_ref):
    TB, S, _ = x_ref.shape
    M = TB * S
    f32, bf16 = jnp.float32, jnp.bfloat16

    # packed small constants (one VMEM buffer instead of ~9 tiny ones)
    vec = vec_ref[...]                                                # (16, 128)
    emb_b = vec[ROW_EMB_B:ROW_EMB_B + 1, :D_MODEL]
    bo    = vec[ROW_BO:ROW_BO + 1, :D_MODEL]
    ln1_g = vec[ROW_LN1G:ROW_LN1G + 1, :D_MODEL]
    ln1_b = vec[ROW_LN1B:ROW_LN1B + 1, :D_MODEL]
    ff2_b = vec[ROW_FF2B:ROW_FF2B + 1, :D_MODEL]
    ln2_g = vec[ROW_LN2G:ROW_LN2G + 1, :D_MODEL]
    ln2_b = vec[ROW_LN2B:ROW_LN2B + 1, :D_MODEL]
    fc1_b = vec[ROW_FC1B:ROW_FC1B + 1, :FC1_PAD]
    fc2_b = vec[ROW_FC2B:ROW_FC2B + 1, :OUT_PAD]

    x = x_ref[...]                                                    # (TB, S, 2)

    # --- embedding Linear(2,64) on the VPU (contraction depth 2 not worth the MXU)
    #     + positional encoding, all in f32 ---
    h3 = (x[..., 0:1] * emb_w_ref[0:1, :]
          + x[..., 1:2] * emb_w_ref[1:2, :]
          + emb_b
          + pe_ref[...][None])                                        # (TB, S, 64)
    h = h3.reshape(M, D_MODEL)                                        # (B*S, 64)

    # --- fused QKV projection: single (M,64)x(64,192) bf16 matmul, f32 bias add,
    #     then one bf16 copy reused by both heads ---
    hb = h.astype(bf16)
    qkv = jnp.dot(hb, qkv_w_ref[...], preferred_element_type=f32) + qkv_b_ref[...]
    qkv3 = qkv.astype(bf16).reshape(TB, S, 3 * D_MODEL)               # (TB, S, 192)

    scale = 1.0 / math.sqrt(HEAD_DIM)
    attn = jnp.zeros((M, D_MODEL), f32)
    for hd in range(NHEAD):
        lo = hd * HEAD_DIM
        # TODO(synk): head_dim=32 < 128-lane tile, so these per-head lane slices still
        # cost a small relayout; fully removing them needs 6 separate tiny matmuls.
        qh = qkv3[:, :, lo:lo + HEAD_DIM]                             # (TB, S, 32)
        kh = qkv3[:, :, D_MODEL + lo:D_MODEL + lo + HEAD_DIM]
        vh = qkv3[:, :, 2 * D_MODEL + lo:2 * D_MODEL + lo + HEAD_DIM]
        s = jnp.einsum('bqe,bke->bqk', qh, kh,
                       preferred_element_type=f32) * scale            # (TB, S, S)
        s = s - jnp.max(s, axis=-1, keepdims=True)
        p = jnp.exp(s)
        p = p * pl.reciprocal(jnp.sum(p, axis=-1, keepdims=True), approx=True)
        ctx = jnp.einsum('bqk,bke->bqe', p.astype(bf16), vh,
                         preferred_element_type=f32)                  # (TB, S, 32)
        # per-head output projection accumulated -> no lane-axis concatenate;
        # wo row slices (0:32 / 32:64) are sublane-aligned (free).
        attn = attn + jnp.dot(ctx.reshape(M, HEAD_DIM).astype(bf16),
                              wo_ref[lo:lo + HEAD_DIM, :],
                              preferred_element_type=f32)             # (M, 64)
    attn = attn + bo

    # residual + LayerNorm1 (post-norm; dropout identity in eval mode)
    h = _layernorm(h + attn, ln1_g, ln1_b)

    # --- feed-forward: Linear(64,256) -> ReLU -> Linear(256,64) ---
    f = jnp.dot(h.astype(bf16), ff1_w_ref[...],
                preferred_element_type=f32) + ff1_b_ref[...]
    f = jnp.maximum(f, 0.0)
    f = jnp.dot(f.astype(bf16), ff2_w_ref[...],
                preferred_element_type=f32) + ff2_b

    # residual + LayerNorm2
    h = _layernorm(h + f, ln2_g, ln2_b)

    # --- mean pool over sequence (static 1/S multiply) ---
    pooled = jnp.sum(h.reshape(TB, S, D_MODEL), axis=1) * (1.0 / S)   # (TB, 64)

    # --- classifier head (FC1 padded 63->64, FC2 padded to 128 lanes) ---
    z = jnp.dot(pooled.astype(bf16), fc1_w_ref[...],
                preferred_element_type=f32) + fc1_b
    z = jnp.maximum(z, 0.0)
    z = jnp.dot(z.astype(bf16), fc2_w_ref[...],
                preferred_element_type=f32) + fc2_b                   # (TB, 128)
    o_ref[...] = jax.nn.sigmoid(z).astype(o_ref.dtype)                # dense (TB,128) store


def init_params(key):
    ks = jax.random.split(key, 16)

    def w(k, shape, scale=0.1):
        return (scale * jax.random.normal(k, shape)).astype(jnp.float32)

    # positional-encoding buffer (same construction as the PyTorch module)
    pos = jnp.arange(MAX_LEN, dtype=jnp.float32)[:, None]
    div = jnp.exp(jnp.arange(0, D_MODEL, 2, dtype=jnp.float32)
                  * (-math.log(10000.0) / D_MODEL))
    pe = jnp.zeros((MAX_LEN, D_MODEL), jnp.float32)
    pe = pe.at[:, 0::2].set(jnp.sin(pos * div))
    pe = pe.at[:, 1::2].set(jnp.cos(pos * div))

    return dict(
        pe=pe,
        emb_w=w(ks[0], (D_MODEL, IN_FEAT)),  emb_b=w(ks[1], (D_MODEL,), 0.02),
        w_q=w(ks[2], (D_MODEL, D_MODEL)),    b_q=w(ks[3], (D_MODEL,), 0.02),
        w_k=w(ks[4], (D_MODEL, D_MODEL)),    b_k=w(ks[5], (D_MODEL,), 0.02),
        w_v=w(ks[6], (D_MODEL, D_MODEL)),    b_v=w(ks[7], (D_MODEL,), 0.02),
        w_o=w(ks[8], (D_MODEL, D_MODEL)),    b_o=w(ks[9], (D_MODEL,), 0.02),
        ln1_g=jnp.ones((D_MODEL,), jnp.float32), ln1_b=jnp.zeros((D_MODEL,), jnp.float32),
        ff1_w=w(ks[10], (D_FF, D_MODEL)),    ff1_b=w(ks[11], (D_FF,), 0.02),
        ff2_w=w(ks[12], (D_MODEL, D_FF)),    ff2_b=w(ks[13], (D_MODEL,), 0.02),
        ln2_g=jnp.ones((D_MODEL,), jnp.float32), ln2_b=jnp.zeros((D_MODEL,), jnp.float32),
        fc1_w=w(ks[14], (FC1_OUT, D_MODEL)), fc1_b=jnp.zeros((FC1_OUT,), jnp.float32),
        fc2_w=w(ks[15], (1, FC1_OUT)),       fc2_b=jnp.zeros((1,), jnp.float32),
    )


def prepare_kernel_params(p):
    """One-time prep: transpose weights to (in,out), fuse QKV weight/bias, pad
    FC1/FC2 lane-dense, cast MXU-side weights to bf16, and pack the small f32
    bias / LayerNorm / classifier-bias vectors into one (16,128) slab.
    NOTE: the zero padding of FC1 col 63, FC2 rows/cols and output lanes 1..127
    is load-bearing for correctness — keep it intact on any weight reload."""
    f32, bf16 = jnp.float32, jnp.bfloat16

    w_qkv = jnp.concatenate([p['w_q'].T, p['w_k'].T, p['w_v'].T], axis=1)  # (64, 192)
    b_qkv = jnp.concatenate([p['b_q'], p['b_k'], p['b_v']]).reshape(1, 3 * D_MODEL)

    fc1_wt = jnp.zeros((D_MODEL, FC1_PAD), f32).at[:, :FC1_OUT].set(p['fc1_w'].T)
    fc2_wt = jnp.zeros((FC1_PAD, OUT_PAD), f32).at[:FC1_OUT, :1].set(p['fc2_w'].T)

    vec = jnp.zeros((SLAB_ROWS, OUT_PAD), f32)
    vec = vec.at[ROW_EMB_B, :D_MODEL].set(p['emb_b'])
    vec = vec.at[ROW_BO,    :D_MODEL].set(p['b_o'])
    vec = vec.at[ROW_LN1G,  :D_MODEL].set(p['ln1_g'])
    vec = vec.at[ROW_LN1B,  :D_MODEL].set(p['ln1_b'])
    vec = vec.at[ROW_FF2B,  :D_MODEL].set(p['ff2_b'])
    vec = vec.at[ROW_LN2G,  :D_MODEL].set(p['ln2_g'])
    vec = vec.at[ROW_LN2B,  :D_MODEL].set(p['ln2_b'])
    vec = vec.at[ROW_FC1B,  :FC1_OUT].set(p['fc1_b'])
    vec = vec.at[ROW_FC2B,  :1].set(p['fc2_b'])

    return dict(
        pe=p['pe'],
        emb_w=p['emb_w'].T.astype(f32),                      # (2, 64), VPU path
        qkv_w=w_qkv.astype(bf16), qkv_b=b_qkv.astype(f32),
        wo=p['w_o'].T.astype(bf16),
        ff1_w=p['ff1_w'].T.astype(bf16), ff1_b=p['ff1_b'].reshape(1, -1).astype(f32),
        ff2_w=p['ff2_w'].T.astype(bf16),
        fc1_w=fc1_wt.astype(bf16), fc2_w=fc2_wt.astype(bf16),
        vec=vec,
    )


def _pick_tb(B, S):
    """Batch tile: target M = TB*S around ~2048 rows (review band 512-4096),
    cap for v7x's 64 MiB VMEM, keep >=2 grid steps (2 TensorCores on v7x) when
    B allows, and keep the output-block sublane dim a multiple of 8."""
    cap = max(8, min(512, 2048 // max(S, 1)))
    if B <= 8:
        return B                          # single block; block dim == array dim (legal)
    half = max(8, (B // 2) // 8 * 8)      # >=2 steps, sublane-aligned
    return max(8, min(cap, half))


@jax.jit
def transformer_forward(x, kp):
    B, S, _ = x.shape
    TB = _pick_tb(B, S)

    args = [x, kp['pe'][:S], kp['emb_w'],
            kp['qkv_w'], kp['qkv_b'], kp['wo'],
            kp['ff1_w'], kp['ff1_b'], kp['ff2_w'],
            kp['fc1_w'], kp['fc2_w'], kp['vec']]

    def const_spec(a):
        nd = a.ndim
        return pl.BlockSpec(a.shape, lambda b, _n=nd: (0,) * _n)     # weights stay resident

    in_specs = ([pl.BlockSpec((TB, S, IN_FEAT), lambda b: (b, 0, 0))]
                + [const_spec(a) for a in args[1:]])
    # 2-D lane- and sublane-dense output slab; real value lives in column 0.
    out_specs = pl.BlockSpec((TB, OUT_PAD), lambda b: (b, 0))

    # If B % TB != 0, the last block computes on padded garbage batch rows; their
    # outputs are discarded by the output BlockSpec and they never mix with valid
    # rows (attention / pooling are per-batch-element).
    out = pl.pallas_call(
        transformer_kernel,
        out_shape=jax.ShapeDtypeStruct((B, OUT_PAD), jnp.float32),
        grid=(pl.cdiv(B, TB),),
        in_specs=in_specs,
        out_specs=out_specs,
        compiler_params=pltpu.CompilerParams(
            dimension_semantics=("parallel",),
            vmem_limit_bytes=48 * 1024 * 1024),   # below v7x's 64 MiB, above v5e default
    )(*args)
    return out[:, :1]                                                 # (B, 1)


def reference_forward(x, p):
    """Pure-JAX f32 reference mirroring PyTorch semantics (eval mode)."""
    B, S, _ = x.shape
    h = jnp.einsum('bsi,oi->bso', x, p['emb_w']) + p['emb_b']
    h = h + p['pe'][:S][None]
    q = jnp.einsum('bsd,od->bso', h, p['w_q']) + p['b_q']
    k = jnp.einsum('bsd,od->bso', h, p['w_k']) + p['b_k']
    v = jnp.einsum('bsd,od->bso', h, p['w_v']) + p['b_v']
    qh = q.reshape(B, S, NHEAD, HEAD_DIM).transpose(0, 2, 1, 3)
    kh = k.reshape(B, S, NHEAD, HEAD_DIM).transpose(0, 2, 1, 3)
    vh = v.reshape(B, S, NHEAD, HEAD_DIM).transpose(0, 2, 1, 3)
    s = jnp.einsum('bhqd,bhkd->bhqk', qh, kh) / math.sqrt(HEAD_DIM)
    a = jax.nn.softmax(s, axis=-1)
    o = jnp.einsum('bhqk,bhkd->bhqd', a, vh).transpose(0, 2, 1, 3).reshape(B, S, D_MODEL)
    attn = jnp.einsum('bsd,od->bso', o, p['w_o']) + p['b_o']
    h = _layernorm(h + attn, p['ln1_g'], p['ln1_b'])
    f = jnp.maximum(jnp.einsum('bsd,od->bso', h, p['ff1_w']) + p['ff1_b'], 0.0)
    f = jnp.einsum('bsd,od->bso', f, p['ff2_w']) + p['ff2_b']
    h = _layernorm(h + f, p['ln2_g'], p['ln2_b'])
    pooled = jnp.mean(h, axis=1)
    z = jnp.maximum(pooled @ p['fc1_w'].T + p['fc1_b'], 0.0)
    z = z @ p['fc2_w'].T + p['fc2_b']
    return jax.nn.sigmoid(z)


if __name__ == "__main__":
    params = init_params(jax.random.PRNGKey(1))
    kparams = prepare_kernel_params(params)

    # small primary check (B=2, S=8) plus a multi-step-grid check (B=16 -> TB=8, 2 steps)
    for B, S in [(2, 8), (16, 8)]:
        x = jax.random.normal(jax.random.PRNGKey(0), (B, S, IN_FEAT), jnp.float32)
        out = jax.block_until_ready(transformer_forward(x, kparams))
        ref = reference_forward(x, params)
        assert out.shape == (B, 1), out.shape
        assert bool(jnp.all(jnp.isfinite(out)))
        # bf16 MXU operands + approx reciprocal softmax vs pure-f32 reference
        assert bool(jnp.allclose(out, ref, atol=2e-2, rtol=2e-2)), (B, S, out, ref)
    print("KERNEL_OK")
</pallas_src>

<mosaic_0001>
module attributes {stable_mosaic.version = 11 : i64} {
  func.func @transformer_kernel(%arg0: i32, %arg1: memref<2x8x2xf32, #tpu.memory_space<vmem>>, %arg2: memref<8x64xf32, #tpu.memory_space<vmem>>, %arg3: memref<2x64xf32, #tpu.memory_space<vmem>>, %arg4: memref<64x192xbf16, #tpu.memory_space<vmem>>, %arg5: memref<1x192xf32, #tpu.memory_space<vmem>>, %arg6: memref<64x64xbf16, #tpu.memory_space<vmem>>, %arg7: memref<64x256xbf16, #tpu.memory_space<vmem>>, %arg8: memref<1x256xf32, #tpu.memory_space<vmem>>, %arg9: memref<256x64xbf16, #tpu.memory_space<vmem>>, %arg10: memref<64x64xbf16, #tpu.memory_space<vmem>>, %arg11: memref<64x128xbf16, #tpu.memory_space<vmem>>, %arg12: memref<16x128xf32, #tpu.memory_space<vmem>>, %arg13: memref<2x128xf32, #tpu.memory_space<vmem>>) attributes {dimension_semantics = [#tpu.dimension_semantics<parallel>], iteration_bounds = array<i64: 1>, scalar_prefetch = 0 : i64, scratch_operands = 0 : i64, tpu.core_type = #tpu.core_type<tc>, window_params = [{transform_indices = @transform_0, window_bounds = array<i64: 2, 8, 2>}, {pipeline_mode = #tpu.pipeline_mode<synchronous>, transform_indices = @transform_1, window_bounds = array<i64: 8, 64>}, {pipeline_mode = #tpu.pipeline_mode<synchronous>, transform_indices = @transform_2, window_bounds = array<i64: 2, 64>}, {pipeline_mode = #tpu.pipeline_mode<synchronous>, transform_indices = @transform_3, window_bounds = array<i64: 64, 192>}, {pipeline_mode = #tpu.pipeline_mode<synchronous>, transform_indices = @transform_4, window_bounds = array<i64: 1, 192>}, {pipeline_mode = #tpu.pipeline_mode<synchronous>, transform_indices = @transform_5, window_bounds = array<i64: 64, 64>}, {pipeline_mode = #tpu.pipeline_mode<synchronous>, transform_indices = @transform_6, window_bounds = array<i64: 64, 256>}, {pipeline_mode = #tpu.pipeline_mode<synchronous>, transform_indices = @transform_7, window_bounds = array<i64: 1, 256>}, {pipeline_mode = #tpu.pipeline_mode<synchronous>, transform_indices = @transform_8, window_bounds = array<i64: 256, 64>}, {pipeline_mode = #tpu.pipeline_mode<synchronous>, transform_indices = @transform_9, window_bounds = array<i64: 64, 64>}, {pipeline_mode = #tpu.pipeline_mode<synchronous>, transform_indices = @transform_10, window_bounds = array<i64: 64, 128>}, {pipeline_mode = #tpu.pipeline_mode<synchronous>, transform_indices = @transform_11, window_bounds = array<i64: 16, 128>}, {transform_indices = @transform_12, window_bounds = array<i64: 2, 128>}]} {
    %c0 = arith.constant 0 : index
    %c0_0 = arith.constant 0 : index
    %0 = vector.load %arg12[%c0, %c0_0] : memref<16x128xf32, #tpu.memory_space<vmem>>, vector<16x128xf32>
    %1 = vector.extract_strided_slice %0 {offsets = [0, 0], sizes = [1, 64], strides = [1, 1]} : vector<16x128xf32> to vector<1x64xf32>
    %2 = vector.extract_strided_slice %0 {offsets = [1, 0], sizes = [1, 64], strides = [1, 1]} : vector<16x128xf32> to vector<1x64xf32>
    %3 = vector.extract_strided_slice %0 {offsets = [2, 0], sizes = [1, 64], strides = [1, 1]} : vector<16x128xf32> to vector<1x64xf32>
    %4 = vector.extract_strided_slice %0 {offsets = [3, 0], sizes = [1, 64], strides = [1, 1]} : vector<16x128xf32> to vector<1x64xf32>
    %5 = vector.extract_strided_slice %0 {offsets = [4, 0], sizes = [1, 64], strides = [1, 1]} : vector<16x128xf32> to vector<1x64xf32>
    %6 = vector.extract_strided_slice %0 {offsets = [5, 0], sizes = [1, 64], strides = [1, 1]} : vector<16x128xf32> to vector<1x64xf32>
    %7 = vector.extract_strided_slice %0 {offsets = [6, 0], sizes = [1, 64], strides = [1, 1]} : vector<16x128xf32> to vector<1x64xf32>
    %8 = vector.extract_strided_slice %0 {offsets = [7, 0], sizes = [1, 64], strides = [1, 1]} : vector<16x128xf32> to vector<1x64xf32>
    %9 = vector.extract_strided_slice %0 {offsets = [8, 0], sizes = [1, 128], strides = [1, 1]} : vector<16x128xf32> to vector<1x128xf32>
    %c0_1 = arith.constant 0 : index
    %c0_2 = arith.constant 0 : index
    %c0_3 = arith.constant 0 : index
    %10 = vector.load %arg1[%c0_1, %c0_2, %c0_3] : memref<2x8x2xf32, #tpu.memory_space<vmem>>, vector<2x8x2xf32>
    %11 = vector.extract_strided_slice %10 {offsets = [0, 0, 0], sizes = [2, 8, 1], strides = [1, 1, 1]} : vector<2x8x2xf32> to vector<2x8x1xf32>
    %c0_4 = arith.constant 0 : index
    %c0_5 = arith.constant 0 : index
    %12 = vector.load %arg3[%c0_4, %c0_5] : memref<2x64xf32, #tpu.memory_space<vmem>>, vector<1x64xf32>
    %13 = vector.shape_cast %12 : vector<1x64xf32> to vector<1x1x64xf32>
    %14 = vector.broadcast %11 : vector<2x8x1xf32> to vector<2x8x64xf32>
    %15 = vector.broadcast %13 : vector<1x1x64xf32> to vector<2x8x64xf32>
    %16 = arith.mulf %14, %15 : vector<2x8x64xf32>
    %17 = vector.extract_strided_slice %10 {offsets = [0, 0, 1], sizes = [2, 8, 1], strides = [1, 1, 1]} : vector<2x8x2xf32> to vector<2x8x1xf32>
    %c1 = arith.constant 1 : index
    %c0_6 = arith.constant 0 : index
    %18 = vector.load %arg3[%c1, %c0_6] : memref<2x64xf32, #tpu.memory_space<vmem>>, vector<1x64xf32>
    %19 = vector.shape_cast %18 : vector<1x64xf32> to vector<1x1x64xf32>
    %20 = vector.broadcast %17 : vector<2x8x1xf32> to vector<2x8x64xf32>
    %21 = vector.broadcast %19 : vector<1x1x64xf32> to vector<2x8x64xf32>
    %22 = arith.mulf %20, %21 : vector<2x8x64xf32>
    %23 = arith.addf %16, %22 : vector<2x8x64xf32>
    %24 = vector.shape_cast %1 : vector<1x64xf32> to vector<1x1x64xf32>
    %25 = vector.broadcast %24 : vector<1x1x64xf32> to vector<2x8x64xf32>
    %26 = arith.addf %23, %25 : vector<2x8x64xf32>
    %c0_7 = arith.constant 0 : index
    %c0_8 = arith.constant 0 : index
    %27 = vector.load %arg2[%c0_7, %c0_8] : memref<8x64xf32, #tpu.memory_space<vmem>>, vector<8x64xf32>
    %28 = vector.shape_cast %27 : vector<8x64xf32> to vector<1x8x64xf32>
    %29 = vector.broadcast %28 : vector<1x8x64xf32> to vector<2x8x64xf32>
    %30 = arith.addf %26, %29 : vector<2x8x64xf32>
    %31 = vector.shape_cast %30 : vector<2x8x64xf32> to vector<16x64xf32>
    %32 = arith.truncf %31 : vector<16x64xf32> to vector<16x64xbf16>
    %c0_9 = arith.constant 0 : index
    %c0_10 = arith.constant 0 : index
    %33 = vector.load %arg4[%c0_9, %c0_10] : memref<64x192xbf16, #tpu.memory_space<vmem>>, vector<64x192xbf16>
    %cst = arith.constant dense<0.000000e+00> : vector<16x192xf32>
    %34 = tpu.matmul %32, %33, %cst {dimension_numbers = #tpu.dot_dimension_numbers<[1], [0], [0], [1], [0, 0, 1, 1], [], []>} : vector<16x64xbf16>, vector<64x192xbf16>, vector<16x192xf32> -> vector<16x192xf32>
    %c0_11 = arith.constant 0 : index
    %c0_12 = arith.constant 0 : index
    %35 = vector.load %arg5[%c0_11, %c0_12] : memref<1x192xf32, #tpu.memory_space<vmem>>, vector<1x192xf32>
    %36 = vector.broadcast %35 : vector<1x192xf32> to vector<16x192xf32>
    %37 = arith.addf %34, %36 : vector<16x192xf32>
    %38 = arith.truncf %37 : vector<16x192xf32> to vector<16x192xbf16>
    %39 = vector.shape_cast %38 : vector<16x192xbf16> to vector<2x8x192xbf16>
    %cst_13 = arith.constant 0.000000e+00 : f32
    %40 = vector.broadcast %cst_13 : f32 to vector<16x64xf32>
    %41 = vector.extract_strided_slice %39 {offsets = [0, 0, 0], sizes = [2, 8, 32], strides = [1, 1, 1]} : vector<2x8x192xbf16> to vector<2x8x32xbf16>
    %42 = vector.extract_strided_slice %39 {offsets = [0, 0, 64], sizes = [2, 8, 32], strides = [1, 1, 1]} : vector<2x8x192xbf16> to vector<2x8x32xbf16>
    %43 = vector.extract_strided_slice %39 {offsets = [0, 0, 128], sizes = [2, 8, 32], strides = [1, 1, 1]} : vector<2x8x192xbf16> to vector<2x8x32xbf16>
    "tpu.trace_start"() <{level = 10 : i32, message = "bqe,bke->bqk"}> : () -> ()
    %cst_14 = arith.constant dense<0.000000e+00> : vector<2x8x8xf32>
    %44 = tpu.matmul %41, %42, %cst_14 {dimension_numbers = #tpu.dot_dimension_numbers<[2], [2], [1], [1], [0, 0, 0, 1, 1, 1], [0], [0]>} : vector<2x8x32xbf16>, vector<2x8x32xbf16>, vector<2x8x8xf32> -> vector<2x8x8xf32>
    "tpu.trace_stop"() : () -> ()
    %cst_15 = arith.constant 0.176776692 : f32
    %45 = vector.broadcast %cst_15 : f32 to vector<2x8x8xf32>
    %46 = arith.mulf %44, %45 : vector<2x8x8xf32>
    %cst_16 = arith.constant dense<0xFF800000> : vector<2x8xf32>
    %47 = vector.multi_reduction <maximumf>, %46, %cst_16 [2] : vector<2x8x8xf32> to vector<2x8xf32>
    %48 = vector.shape_cast %47 : vector<2x8xf32> to vector<2x8x1xf32>
    %49 = vector.broadcast %48 : vector<2x8x1xf32> to vector<2x8x8xf32>
    %50 = arith.subf %46, %49 : vector<2x8x8xf32>
    %51 = math.exp %50 : vector<2x8x8xf32>
    %cst_17 = arith.constant dense<0.000000e+00> : vector<2x8xf32>
    %52 = vector.multi_reduction <add>, %51, %cst_17 [2] : vector<2x8x8xf32> to vector<2x8xf32>
    %53 = vector.shape_cast %52 : vector<2x8xf32> to vector<2x8x1xf32>
    %54 = tpu.reciprocal %53 {approx = true} : vector<2x8x1xf32> -> vector<2x8x1xf32>
    %55 = vector.broadcast %54 : vector<2x8x1xf32> to vector<2x8x8xf32>
    %56 = arith.mulf %51, %55 : vector<2x8x8xf32>
    %57 = arith.truncf %56 : vector<2x8x8xf32> to vector<2x8x8xbf16>
    "tpu.trace_start"() <{level = 10 : i32, message = "bqk,bke->bqe"}> : () -> ()
    %cst_18 = arith.constant dense<0.000000e+00> : vector<2x8x32xf32>
    %58 = tpu.matmul %57, %43, %cst_18 {dimension_numbers = #tpu.dot_dimension_numbers<[2], [1], [1], [2], [0, 0, 0, 1, 1, 2], [0], [0]>} : vector<2x8x8xbf16>, vector<2x8x32xbf16>, vector<2x8x32xf32> -> vector<2x8x32xf32>
    "tpu.trace_stop"() : () -> ()
    %59 = vector.shape_cast %58 : vector<2x8x32xf32> to vector<16x32xf32>
    %60 = arith.truncf %59 : vector<16x32xf32> to vector<16x32xbf16>
    %c0_19 = arith.constant 0 : index
    %c0_20 = arith.constant 0 : index
    %61 = vector.load %arg6[%c0_19, %c0_20] : memref<64x64xbf16, #tpu.memory_space<vmem>>, vector<32x64xbf16>
    %cst_21 = arith.constant dense<0.000000e+00> : vector<16x64xf32>
    %62 = tpu.matmul %60, %61, %cst_21 {dimension_numbers = #tpu.dot_dimension_numbers<[1], [0], [0], [1], [0, 0, 1, 1], [], []>} : vector<16x32xbf16>, vector<32x64xbf16>, vector<16x64xf32> -> vector<16x64xf32>
    %63 = arith.addf %40, %62 : vector<16x64xf32>
    %64 = vector.extract_strided_slice %39 {offsets = [0, 0, 32], sizes = [2, 8, 32], strides = [1, 1, 1]} : vector<2x8x192xbf16> to vector<2x8x32xbf16>
    %65 = vector.extract_strided_slice %39 {offsets = [0, 0, 96], sizes = [2, 8, 32], strides = [1, 1, 1]} : vector<2x8x192xbf16> to vector<2x8x32xbf16>
    %66 = vector.extract_strided_slice %39 {offsets = [0, 0, 160], sizes = [2, 8, 32], strides = [1, 1, 1]} : vector<2x8x192xbf16> to vector<2x8x32xbf16>
    "tpu.trace_start"() <{level = 10 : i32, message = "bqe,bke->bqk"}> : () -> ()
    %cst_22 = arith.constant dense<0.000000e+00> : vector<2x8x8xf32>
    %67 = tpu.matmul %64, %65, %cst_22 {dimension_numbers = #tpu.dot_dimension_numbers<[2], [2], [1], [1], [0, 0, 0, 1, 1, 1], [0], [0]>} : vector<2x8x32xbf16>, vector<2x8x32xbf16>, vector<2x8x8xf32> -> vector<2x8x8xf32>
    "tpu.trace_stop"() : () -> ()
    %cst_23 = arith.constant 0.176776692 : f32
    %68 = vector.broadcast %cst_23 : f32 to vector<2x8x8xf32>
    %69 = arith.mulf %67, %68 : vector<2x8x8xf32>
    %cst_24 = arith.constant dense<0xFF800000> : vector<2x8xf32>
    %70 = vector.multi_reduction <maximumf>, %69, %cst_24 [2] : vector<2x8x8xf32> to vector<2x8xf32>
    %71 = vector.shape_cast %70 : vector<2x8xf32> to vector<2x8x1xf32>
    %72 = vector.broadcast %71 : vector<2x8x1xf32> to vector<2x8x8xf32>
    %73 = arith.subf %69, %72 : vector<2x8x8xf32>
    %74 = math.exp %73 : vector<2x8x8xf32>
    %cst_25 = arith.constant dense<0.000000e+00> : vector<2x8xf32>
    %75 = vector.multi_reduction <add>, %74, %cst_25 [2] : vector<2x8x8xf32> to vector<2x8xf32>
    %76 = vector.shape_cast %75 : vector<2x8xf32> to vector<2x8x1xf32>
    %77 = tpu.reciprocal %76 {approx = true} : vector<2x8x1xf32> -> vector<2x8x1xf32>
    %78 = vector.broadcast %77 : vector<2x8x1xf32> to vector<2x8x8xf32>
    %79 = arith.mulf %74, %78 : vector<2x8x8xf32>
    %80 = arith.truncf %79 : vector<2x8x8xf32> to vector<2x8x8xbf16>
    "tpu.trace_start"() <{level = 10 : i32, message = "bqk,bke->bqe"}> : () -> ()
    %cst_26 = arith.constant dense<0.000000e+00> : vector<2x8x32xf32>
    %81 = tpu.matmul %80, %66, %cst_26 {dimension_numbers = #tpu.dot_dimension_numbers<[2], [1], [1], [2], [0, 0, 0, 1, 1, 2], [0], [0]>} : vector<2x8x8xbf16>, vector<2x8x32xbf16>, vector<2x8x32xf32> -> vector<2x8x32xf32>
    "tpu.trace_stop"() : () -> ()
    %82 = vector.shape_cast %81 : vector<2x8x32xf32> to vector<16x32xf32>
    %83 = arith.truncf %82 : vector<16x32xf32> to vector<16x32xbf16>
    %c32 = arith.constant 32 : index
    %c0_27 = arith.constant 0 : index
    %84 = vector.load %arg6[%c32, %c0_27] : memref<64x64xbf16, #tpu.memory_space<vmem>>, vector<32x64xbf16>
    %cst_28 = arith.constant dense<0.000000e+00> : vector<16x64xf32>
    %85 = tpu.matmul %83, %84, %cst_28 {dimension_numbers = #tpu.dot_dimension_numbers<[1], [0], [0], [1], [0, 0, 1, 1], [], []>} : vector<16x32xbf16>, vector<32x64xbf16>, vector<16x64xf32> -> vector<16x64xf32>
    %86 = arith.addf %63, %85 : vector<16x64xf32>
    %87 = vector.broadcast %2 : vector<1x64xf32> to vector<16x64xf32>
    %88 = arith.addf %86, %87 : vector<16x64xf32>
    %89 = arith.addf %31, %88 : vector<16x64xf32>
    %cst_29 = arith.constant dense<0.000000e+00> : vector<16xf32>
    %90 = vector.multi_reduction <add>, %89, %cst_29 [1] : vector<16x64xf32> to vector<16xf32>
    %91 = vector.shape_cast %90 : vector<16xf32> to vector<16x1xf32>
    %cst_30 = arith.constant 6.400000e+01 : f32
    %92 = vector.broadcast %cst_30 : f32 to vector<16x1xf32>
    %93 = arith.divf %91, %92 : vector<16x1xf32>
    %94 = vector.broadcast %93 : vector<16x1xf32> to vector<16x64xf32>
    %95 = arith.subf %89, %94 : vector<16x64xf32>
    %96 = arith.mulf %95, %95 : vector<16x64xf32>
    %cst_31 = arith.constant dense<0.000000e+00> : vector<16xf32>
    %97 = vector.multi_reduction <add>, %96, %cst_31 [1] : vector<16x64xf32> to vector<16xf32>
    %98 = vector.shape_cast %97 : vector<16xf32> to vector<16x1xf32>
    %cst_32 = arith.constant 6.400000e+01 : f32
    %99 = vector.broadcast %cst_32 : f32 to vector<16x1xf32>
    %100 = arith.divf %98, %99 : vector<16x1xf32>
    %101 = vector.broadcast %93 : vector<16x1xf32> to vector<16x64xf32>
    %102 = arith.subf %89, %101 : vector<16x64xf32>
    %cst_33 = arith.constant 9.99999974E-6 : f32
    %103 = vector.broadcast %cst_33 : f32 to vector<16x1xf32>
    %104 = arith.addf %100, %103 : vector<16x1xf32>
    %105 = math.rsqrt %104 : vector<16x1xf32>
    %106 = vector.broadcast %105 : vector<16x1xf32> to vector<16x64xf32>
    %107 = arith.mulf %102, %106 : vector<16x64xf32>
    %108 = vector.broadcast %3 : vector<1x64xf32> to vector<16x64xf32>
    %109 = arith.mulf %107, %108 : vector<16x64xf32>
    %110 = vector.broadcast %4 : vector<1x64xf32> to vector<16x64xf32>
    %111 = arith.addf %109, %110 : vector<16x64xf32>
    %112 = arith.truncf %111 : vector<16x64xf32> to vector<16x64xbf16>
    %c0_34 = arith.constant 0 : index
    %c0_35 = arith.constant 0 : index
    %113 = vector.load %arg7[%c0_34, %c0_35] : memref<64x256xbf16, #tpu.memory_space<vmem>>, vector<64x256xbf16>
    %cst_36 = arith.constant dense<0.000000e+00> : vector<16x256xf32>
    %114 = tpu.matmul %112, %113, %cst_36 {dimension_numbers = #tpu.dot_dimension_numbers<[1], [0], [0], [1], [0, 0, 1, 1], [], []>} : vector<16x64xbf16>, vector<64x256xbf16>, vector<16x256xf32> -> vector<16x256xf32>
    %c0_37 = arith.constant 0 : index
    %c0_38 = arith.constant 0 : index
    %115 = vector.load %arg8[%c0_37, %c0_38] : memref<1x256xf32, #tpu.memory_space<vmem>>, vector<1x256xf32>
    %116 = vector.broadcast %115 : vector<1x256xf32> to vector<16x256xf32>
    %117 = arith.addf %114, %116 : vector<16x256xf32>
    %cst_39 = arith.constant 0.000000e+00 : f32
    %118 = vector.broadcast %cst_39 : f32 to vector<16x256xf32>
    %119 = arith.maximumf %117, %118 : vector<16x256xf32>
    %120 = arith.truncf %119 : vector<16x256xf32> to vector<16x256xbf16>
    %c0_40 = arith.constant 0 : index
    %c0_41 = arith.constant 0 : index
    %121 = vector.load %arg9[%c0_40, %c0_41] : memref<256x64xbf16, #tpu.memory_space<vmem>>, vector<256x64xbf16>
    %cst_42 = arith.constant dense<0.000000e+00> : vector<16x64xf32>
    %122 = tpu.matmul %120, %121, %cst_42 {dimension_numbers = #tpu.dot_dimension_numbers<[1], [0], [0], [1], [0, 0, 1, 1], [], []>} : vector<16x256xbf16>, vector<256x64xbf16>, vector<16x64xf32> -> vector<16x64xf32>
    %123 = vector.broadcast %5 : vector<1x64xf32> to vector<16x64xf32>
    %124 = arith.addf %122, %123 : vector<16x64xf32>
    %125 = arith.addf %111, %124 : vector<16x64xf32>
    %cst_43 = arith.constant dense<0.000000e+00> : vector<16xf32>
    %126 = vector.multi_reduction <add>, %125, %cst_43 [1] : vector<16x64xf32> to vector<16xf32>
    %127 = vector.shape_cast %126 : vector<16xf32> to vector<16x1xf32>
    %cst_44 = arith.constant 6.400000e+01 : f32
    %128 = vector.broadcast %cst_44 : f32 to vector<16x1xf32>
    %129 = arith.divf %127, %128 : vector<16x1xf32>
    %130 = vector.broadcast %129 : vector<16x1xf32> to vector<16x64xf32>
    %131 = arith.subf %125, %130 : vector<16x64xf32>
    %132 = arith.mulf %131, %131 : vector<16x64xf32>
    %cst_45 = arith.constant dense<0.000000e+00> : vector<16xf32>
    %133 = vector.multi_reduction <add>, %132, %cst_45 [1] : vector<16x64xf32> to vector<16xf32>
    %134 = vector.shape_cast %133 : vector<16xf32> to vector<16x1xf32>
    %cst_46 = arith.constant 6.400000e+01 : f32
    %135 = vector.broadcast %cst_46 : f32 to vector<16x1xf32>
    %136 = arith.divf %134, %135 : vector<16x1xf32>
    %137 = vector.broadcast %129 : vector<16x1xf32> to vector<16x64xf32>
    %138 = arith.subf %125, %137 : vector<16x64xf32>
    %cst_47 = arith.constant 9.99999974E-6 : f32
    %139 = vector.broadcast %cst_47 : f32 to vector<16x1xf32>
    %140 = arith.addf %136, %139 : vector<16x1xf32>
    %141 = math.rsqrt %140 : vector<16x1xf32>
    %142 = vector.broadcast %141 : vector<16x1xf32> to vector<16x64xf32>
    %143 = arith.mulf %138, %142 : vector<16x64xf32>
    %144 = vector.broadcast %6 : vector<1x64xf32> to vector<16x64xf32>
    %145 = arith.mulf %143, %144 : vector<16x64xf32>
    %146 = vector.broadcast %7 : vector<1x64xf32> to vector<16x64xf32>
    %147 = arith.addf %145, %146 : vector<16x64xf32>
    %148 = vector.shape_cast %147 : vector<16x64xf32> to vector<2x8x64xf32>
    %cst_48 = arith.constant dense<0.000000e+00> : vector<2x64xf32>
    %149 = vector.multi_reduction <add>, %148, %cst_48 [1] : vector<2x8x64xf32> to vector<2x64xf32>
    %cst_49 = arith.constant 1.250000e-01 : f32
    %150 = vector.broadcast %cst_49 : f32 to vector<2x64xf32>
    %151 = arith.mulf %149, %150 : vector<2x64xf32>
    %152 = arith.truncf %151 : vector<2x64xf32> to vector<2x64xbf16>
    %c0_50 = arith.constant 0 : index
    %c0_51 = arith.constant 0 : index
    %153 = vector.load %arg10[%c0_50, %c0_51] : memref<64x64xbf16, #tpu.memory_space<vmem>>, vector<64x64xbf16>
    %cst_52 = arith.constant dense<0.000000e+00> : vector<2x64xf32>
    %154 = tpu.matmul %152, %153, %cst_52 {dimension_numbers = #tpu.dot_dimension_numbers<[1], [0], [0], [1], [0, 0, 1, 1], [], []>} : vector<2x64xbf16>, vector<64x64xbf16>, vector<2x64xf32> -> vector<2x64xf32>
    %155 = vector.broadcast %8 : vector<1x64xf32> to vector<2x64xf32>
    %156 = arith.addf %154, %155 : vector<2x64xf32>
    %cst_53 = arith.constant 0.000000e+00 : f32
    %157 = vector.broadcast %cst_53 : f32 to vector<2x64xf32>
    %158 = arith.maximumf %156, %157 : vector<2x64xf32>
    %159 = arith.truncf %158 : vector<2x64xf32> to vector<2x64xbf16>
    %c0_54 = arith.constant 0 : index
    %c0_55 = arith.constant 0 : index
    %160 = vector.load %arg11[%c0_54, %c0_55] : memref<64x128xbf16, #tpu.memory_space<vmem>>, vector<64x128xbf16>
    %cst_56 = arith.constant dense<0.000000e+00> : vector<2x128xf32>
    %161 = tpu.matmul %159, %160, %cst_56 {dimension_numbers = #tpu.dot_dimension_numbers<[1], [0], [0], [1], [0, 0, 1, 1], [], []>} : vector<2x64xbf16>, vector<64x128xbf16>, vector<2x128xf32> -> vector<2x128xf32>
    %162 = vector.broadcast %9 : vector<1x128xf32> to vector<2x128xf32>
    %163 = arith.addf %161, %162 : vector<2x128xf32>
    %164 = arith.negf %163 : vector<2x128xf32>
    %165 = math.exp %164 : vector<2x128xf32>
    %cst_57 = arith.constant 1.000000e+00 : f32
    %166 = vector.broadcast %cst_57 : f32 to vector<2x128xf32>
    %167 = arith.addf %166, %165 : vector<2x128xf32>
    %168 = arith.divf %166, %167 : vector<2x128xf32>
    %c0_58 = arith.constant 0 : index
    %c0_59 = arith.constant 0 : index
    %169 = vector.load %arg13[%c0_58, %c0_59] : memref<2x128xf32, #tpu.memory_space<vmem>>, vector<2x128xf32>
    tpu.vector_store %arg13[%c0_58, %c0_59], %168 {strides = array<i32>} : memref<2x128xf32, #tpu.memory_space<vmem>>, vector<2x128xf32>,
    return
  }
  func.func @transform_0(%arg0: i32) -> (i32, i32, i32) {
    %c0_i32 = arith.constant 0 : i32
    %c0_i32_0 = arith.constant 0 : i32
    %c0_i32_1 = arith.constant 0 : i32
    return %arg0, %c0_i32, %c0_i32_0 : i32, i32, i32
  }
  func.func @transform_1(%arg0: i32) -> (i32, i32) {
    %c0_i32 = arith.constant 0 : i32
    %c0_i32_0 = arith.constant 0 : i32
    %c0_i32_1 = arith.constant 0 : i32
    return %c0_i32, %c0_i32_0 : i32, i32
  }
  func.func @transform_2(%arg0: i32) -> (i32, i32) {
    %c0_i32 = arith.constant 0 : i32
    %c0_i32_0 = arith.constant 0 : i32
    %c0_i32_1 = arith.constant 0 : i32
    return %c0_i32, %c0_i32_0 : i32, i32
  }
  func.func @transform_3(%arg0: i32) -> (i32, i32) {
    %c0_i32 = arith.constant 0 : i32
    %c0_i32_0 = arith.constant 0 : i32
    %c0_i32_1 = arith.constant 0 : i32
    return %c0_i32, %c0_i32_0 : i32, i32
  }
  func.func @transform_4(%arg0: i32) -> (i32, i32) {
    %c0_i32 = arith.constant 0 : i32
    %c0_i32_0 = arith.constant 0 : i32
    %c0_i32_1 = arith.constant 0 : i32
    return %c0_i32, %c0_i32_0 : i32, i32
  }
  func.func @transform_5(%arg0: i32) -> (i32, i32) {
    %c0_i32 = arith.constant 0 : i32
    %c0_i32_0 = arith.constant 0 : i32
    %c0_i32_1 = arith.constant 0 : i32
    return %c0_i32, %c0_i32_0 : i32, i32
  }
  func.func @transform_6(%arg0: i32) -> (i32, i32) {
    %c0_i32 = arith.constant 0 : i32
    %c0_i32_0 = arith.constant 0 : i32
    %c0_i32_1 = arith.constant 0 : i32
    return %c0_i32, %c0_i32_0 : i32, i32
  }
  func.func @transform_7(%arg0: i32) -> (i32, i32) {
    %c0_i32 = arith.constant 0 : i32
    %c0_i32_0 = arith.constant 0 : i32
    %c0_i32_1 = arith.constant 0 : i32
    return %c0_i32, %c0_i32_0 : i32, i32
  }
  func.func @transform_8(%arg0: i32) -> (i32, i32) {
    %c0_i32 = arith.constant 0 : i32
    %c0_i32_0 = arith.constant 0 : i32
    %c0_i32_1 = arith.constant 0 : i32
    return %c0_i32, %c0_i32_0 : i32, i32
  }
  func.func @transform_9(%arg0: i32) -> (i32, i32) {
    %c0_i32 = arith.constant 0 : i32
    %c0_i32_0 = arith.constant 0 : i32
    %c0_i32_1 = arith.constant 0 : i32
    return %c0_i32, %c0_i32_0 : i32, i32
  }
  func.func @transform_10(%arg0: i32) -> (i32, i32) {
    %c0_i32 = arith.constant 0 : i32
    %c0_i32_0 = arith.constant 0 : i32
    %c0_i32_1 = arith.constant 0 : i32
    return %c0_i32, %c0_i32_0 : i32, i32
  }
  func.func @transform_11(%arg0: i32) -> (i32, i32) {
    %c0_i32 = arith.constant 0 : i32
    %c0_i32_0 = arith.constant 0 : i32
    %c0_i32_1 = arith.constant 0 : i32
    return %c0_i32, %c0_i32_0 : i32, i32
  }
  func.func @transform_12(%arg0: i32) -> (i32, i32) {
    %c0_i32 = arith.constant 0 : i32
    %c0_i32_0 = arith.constant 0 : i32
    return %arg0, %c0_i32 : i32, i32
  }
}

</mosaic_0001>

<llo_original>
// kernel: transformer_forward.1
$region0: #{transformer_forward.1}
  #allocation0 [shape = 'u32[]', space=smem, size = 0x4, offset = 0x4, fixed_abs, tag = 'smem constant byte address 0x4 - core index']
  #allocation1 [shape = 'u32[144,128]{1,0:T(1,128)}', space=vmem, size = 0x12000, scoped, tag = 'internal scratch']
  %s0 = inlined_call_operand.vmem [shape: f32[2,8,2], index: 0, kind: input, shape index: {}]
  %s1 = inlined_call_operand.vmem [shape: f32[8,64], index: 1, kind: input, shape index: {}]
  %s2 = inlined_call_operand.vmem [shape: f32[2,64], index: 2, kind: input, shape index: {}]
  %s3 = inlined_call_operand.vmem [shape: bf16[64,192], index: 3, kind: input, shape index: {}]
  %s4 = inlined_call_operand.vmem [shape: f32[1,192], index: 4, kind: input, shape index: {}]
  %s5 = inlined_call_operand.vmem [shape: bf16[64,64], index: 5, kind: input, shape index: {}]
  %s6 = inlined_call_operand.vmem [shape: bf16[64,256], index: 6, kind: input, shape index: {}]
  %s7 = inlined_call_operand.hbm [shape: f32[1,256], index: 7, kind: input, shape index: {}]
  %s8 = inlined_call_operand.vmem [shape: bf16[256,64], index: 8, kind: input, shape index: {}]
  %s9 = inlined_call_operand.vmem [shape: bf16[64,64], index: 9, kind: input, shape index: {}]
  %s10 = inlined_call_operand.vmem [shape: bf16[64,128], index: 10, kind: input, shape index: {}]
  %s11 = inlined_call_operand.vmem [shape: f32[16,128], index: 11, kind: input, shape index: {}]
  %s12 = inlined_call_operand.vmem [shape: f32[2,128], index: 12, kind: output, shape index: {}]
  %s13 = sld [smem:[#allocation0]]
  $region62: #{transformer_forward.1} parent=0
    _
  %s15 = ssub.s32 1, %s13
  %s16 = scalar_select 0, %s15, %s13
  $region1: #{transformer_forward.1} parent=0
    #allocation2 [shape = 'u8[1024]{0}', space=vmem, size = 0x400, scoped, tag = 'input window, operand 7, single buffered']
    #allocation3 [shape = 's32[1]{0}', space=sflag, size = 0x4, scoped, tag = 'scoped memory for transformer_forward.1']
    %17 = vsyncpa [#allocation3], 0
    // Predicated region
    $region2: #{transformer_forward.1} parent=1 // pred_check
      _
    $region3: #{transformer_forward.1} parent=1 // pred_check_branch
      %19 = sbr.rel (0) target = $region5
    $region4: #{transformer_forward.1} parent=1 // pred_region
      _
    $region5: #{transformer_forward.1} parent=1 // pred_fallthru
      _
    // Predicated region
    $region6: #{transformer_forward.1} parent=1 // pred_check
      _
    $region7: #{transformer_forward.1} parent=1 // pred_check_branch
      %21 = sbr.rel (0) target = $region9
    $region8: #{transformer_forward.1} parent=1 // pred_region
      _
    $region9: #{transformer_forward.1} parent=1 // pred_fallthru
      _
    // Predicated region
    $region10: #{transformer_forward.1} parent=1 // pred_check
      _
    $region11: #{transformer_forward.1} parent=1 // pred_check_branch
      %23 = sbr.rel (0) target = $region13
    $region12: #{transformer_forward.1} parent=1 // pred_region
      _
    $region13: #{transformer_forward.1} parent=1 // pred_fallthru
      _
    // Predicated region
    $region14: #{transformer_forward.1} parent=1 // pred_check
      _
    $region15: #{transformer_forward.1} parent=1 // pred_check_branch
      %25 = sbr.rel (0) target = $region17
    $region16: #{transformer_forward.1} parent=1 // pred_region
      _
    $region17: #{transformer_forward.1} parent=1 // pred_fallthru
      _
    // Predicated region
    $region18: #{transformer_forward.1} parent=1 // pred_check
      _
    $region19: #{transformer_forward.1} parent=1 // pred_check_branch
      %27 = sbr.rel (0) target = $region21
    $region20: #{transformer_forward.1} parent=1 // pred_region
      _
    $region21: #{transformer_forward.1} parent=1 // pred_fallthru
      _
    // Predicated region
    $region22: #{transformer_forward.1} parent=1 // pred_check
      _
    $region23: #{transformer_forward.1} parent=1 // pred_check_branch
      %29 = sbr.rel (0) target = $region25
    $region24: #{transformer_forward.1} parent=1 // pred_region
      _
    $region25: #{transformer_forward.1} parent=1 // pred_fallthru
      _
    // Predicated region
    $region26: #{transformer_forward.1} parent=1 // pred_check
      _
    $region27: #{transformer_forward.1} parent=1 // pred_check_branch
      %31 = sbr.rel (0) target = $region29
    $region28: #{transformer_forward.1} parent=1 // pred_region
      _
    $region29: #{transformer_forward.1} parent=1 // pred_fallthru
      _
    // Predicated region
    $region30: #{transformer_forward.1} parent=1 // pred_check
      _
    $region31: #{transformer_forward.1} parent=1 // pred_check_branch
      %33 = sbr.rel (0) target = $region33
    $region32: #{transformer_forward.1} parent=1 // pred_region
      %s35 = ssub.s32 32, 32
      %36 = vsyncadd [#allocation3], %s35
      %s38 = sshll.u32 [#allocation2], 4
      %s39 = int_to_ptr.vmem [resolvable:$true] %s38
      %41 = dma.hbm_to_vmem [thread:$0]  %s7, 32, %s39, [#allocation3]
    $region33: #{transformer_forward.1} parent=1 // pred_fallthru
      _
    // Predicated region
    $region34: #{transformer_forward.1} parent=1 // pred_check
      _
    $region35: #{transformer_forward.1} parent=1 // pred_check_branch
      %43 = sbr.rel (0) target = $region37
    $region36: #{transformer_forward.1} parent=1 // pred_region
      _
    $region37: #{transformer_forward.1} parent=1 // pred_fallthru
      _
    // Predicated region
    $region38: #{transformer_forward.1} parent=1 // pred_check
      _
    $region39: #{transformer_forward.1} parent=1 // pred_check_branch
      %45 = sbr.rel (0) target = $region41
    $region40: #{transformer_forward.1} parent=1 // pred_region
      _
    $region41: #{transformer_forward.1} parent=1 // pred_fallthru
      _
    // Predicated region
    $region42: #{transformer_forward.1} parent=1 // pred_check
      _
    $region43: #{transformer_forward.1} parent=1 // pred_check_branch
      %47 = sbr.rel (0) target = $region45
    $region44: #{transformer_forward.1} parent=1 // pred_region
      _
    $region45: #{transformer_forward.1} parent=1 // pred_fallthru
      _
    // Predicated region
    $region46: #{transformer_forward.1} parent=1 // pred_check
      _
    $region47: #{transformer_forward.1} parent=1 // pred_check_branch
      %49 = sbr.rel (0) target = $region49
    $region48: #{transformer_forward.1} parent=1 // pred_region
      _
    $region49: #{transformer_forward.1} parent=1 // pred_fallthru
      _
    // Predicated region
    $region50: #{transformer_forward.1} parent=1 // pred_check
      _
    $region51: #{transformer_forward.1} parent=1 // pred_check_branch
      %51 = sbr.rel (0) target = $region53
    $region52: #{transformer_forward.1} parent=1 // pred_region
      %52 = dma.done [#allocation3], 32
    $region53: #{transformer_forward.1} parent=1 // pred_fallthru
      _
    %v54 = vld [vmem:[%s11] sm:$0xff]
    %v55 = vld [vmem:[%s11 + $0x8] sm:$0xff]
    %v56 = vld [vmem:[%s0] sm:$0xff]
    %v57 = vld [vmem:[%s0 + $0x8] sm:$0xff]
    %v58 = vld [vmem:[%s2] sm:$0x1]
    %60 = vset.pattern.permute.xlu0 0
    %61 = vperm.xlu0 %60, %v56
    %v62 = vpop.permute.xlu0 %61
    %65 = vset.pattern.permute.xlu0 0
    %66 = vperm.xlu0 %65, %v57
    %v67 = vpop.permute.xlu0 %66
    %v69 = vlaneseq
    %v70 = vshrl.u32 %v69, 7
    %v71 = vsub.s32 0, %v70
    %v72 = vrot.slane %v58, %v71
    %v73 = vmul.f32 %v62, %v72
    %v74 = vmul.f32 %v67, %v72
    %v75 = vld [vmem:[%s2 + $0x1] sm:$0x1]
    %76 = vset.pattern.permute.xlu0 1
    %77 = vperm.xlu0 %76, %v56
    %v78 = vpop.permute.xlu0 %77
    %80 = vset.pattern.permute.xlu0 1
    %81 = vperm.xlu0 %80, %v57
    %v82 = vpop.permute.xlu0 %81
    %v84 = vlaneseq
    %v85 = vshrl.u32 %v84, 7
    %v86 = vsub.s32 0, %v85
    %v87 = vrot.slane %v75, %v86
    %v88 = vmul.f32 %v78, %v87
    %v89 = vmul.f32 %v82, %v87
    %v90 = vadd.f32 %v73, %v88
    %v91 = vadd.f32 %v74, %v89
    %v92 = vlaneseq
    %v93 = vshrl.u32 %v92, 7
    %v94 = vsub.s32 0, %v93
    %v95 = vrot.slane %v54, %v94
    %v96 = vadd.f32 %v90, %v95
    %v97 = vadd.f32 %v91, %v95
    %v98 = vld [vmem:[%s1] sm:$0xff]
    %v99 = vadd.f32 %v96, %v98
    %v100 = vadd.f32 %v97, %v98
    %v101 = vpack.c.bf16 %v100, %v99
    %v102 = vld [vmem:[%s3] sm:$0xff]
    %v103 = vld [vmem:[%s3 + $0x8] sm:$0xff]
    %v104 = vld [vmem:[%s3 + $0x10] sm:$0xff]
    %v105 = vld [vmem:[%s3 + $0x18] sm:$0xff]
    %v106 = vld [vmem:[%s3 + $0x20] sm:$0xff]
    %v107 = vld [vmem:[%s3 + $0x28] sm:$0xff]
    %v108 = vld [vmem:[%s3 + $0x30] sm:$0xff]
    %v109 = vld [vmem:[%s3 + $0x38] sm:$0xff]
    %v110 = vld [vmem:[%s4] sm:$0x3]
    %v112 = vlaneseq
    %v113 = vshrl.u32 %v112, 7
    %v114 = vsub.s32 0, %v113
    %v115 = vrot.slane %v110, %v114
    %v116 = vlaneseq
    %v117 = vshrl.u32 %v116, 7
    %v118 = vsub.s32 1, %v117
    %v119 = vrot.slane %v110, %v118
    %v130 = vunpack.c.l.b16 %v102
    %v131 = vunpack.c.h.b16 %v102
    %v132 = vunpack.c.l.b16 %v103
    %v133 = vunpack.c.h.b16 %v103
    %v134 = vunpack.c.l.b16 %v104
    %v135 = vunpack.c.h.b16 %v104
    %v136 = vunpack.c.l.b16 %v105
    %v137 = vunpack.c.h.b16 %v105
    %v138 = vunpack.c.l.b16 %v106
    %v139 = vunpack.c.h.b16 %v106
    %v140 = vunpack.c.l.b16 %v107
    %v141 = vunpack.c.h.b16 %v107
    %v142 = vunpack.c.l.b16 %v108
    %v143 = vunpack.c.h.b16 %v108
    %v144 = vunpack.c.l.b16 %v109
    %v145 = vunpack.c.h.b16 %v109
    %v146 = vpack.c.b16 %v132, %v130
    %v147 = vpack.c.b16 %v133, %v131
    %v148 = vpack.c.b16 %v136, %v134
    %v149 = vpack.c.b16 %v137, %v135
    %v150 = vpack.c.b16 %v140, %v138
    %v151 = vpack.c.b16 %v141, %v139
    %v152 = vpack.c.b16 %v144, %v142
    %v153 = vpack.c.b16 %v145, %v143
    %vm162 = vcmask 523264
    %v164 = vsel %vm162, %v101, 0
    %166 = vmatprep.subr.bf16.mxu0 %v147
    %167 = vmatpush1.bf16.msra.mxu0 %v146
    %168 = vmatprep.subr.bf16.mxu0 %v149
    %169 = vmatpush1.bf16.msra.mxu0 %v148
    %170 = vmatprep.subr.bf16.mxu0 %v151
    %171 = vmatpush1.bf16.msra.mxu0 %v150
    %172 = vmatprep.subr.bf16.mxu0 %v153
    %173 = vmatpush1.bf16.msra.mxu0 %v152
    %174 = vmatprep.subr.bf16.mxu0 0
    %175 = vmatpush1.bf16.msra.mxu0 0
    %176 = vmatprep.subr.bf16.mxu0 0
    %177 = vmatpush1.bf16.msra.mxu0 0
    %178 = vmatprep.subr.bf16.mxu0 0
    %179 = vmatpush1.bf16.msra.mxu0 0
    %180 = vmatprep.subr.bf16.mxu0 0
    %181 = vmatpush1.bf16.msra.mxu0 0
    %182 = vmatprep.subr.bf16.mxu0 0
    %183 = vmatpush1.bf16.msra.mxu0 0
    %184 = vmatprep.subr.bf16.mxu0 0
    %185 = vmatpush1.bf16.msra.mxu0 0
    %186 = vmatprep.subr.bf16.mxu0 0
    %187 = vmatpush1.bf16.msra.mxu0 0
    %188 = vmatprep.subr.bf16.mxu0 0
    %189 = vmatpush1.bf16.msra.mxu0 0
    %190 = vmatprep.subr.bf16.mxu0 0
    %191 = vmatpush1.bf16.msra.mxu0 0
    %192 = vmatprep.subr.bf16.mxu0 0
    %193 = vmatpush1.bf16.msra.mxu0 0
    %194 = vmatprep.subr.bf16.mxu0 0
    %195 = vmatpush1.bf16.msra.mxu0 0
    %196 = vmatprep.subr.bf16.mxu0 0
    %197 = vmatpush1.bf16.msra.mxu0 0
    %198 = vmatprep.mubr.bf16.mxu0 0
    %199 = vmatmul.mubr.bf16.gmra.mrb[0].mxu0 %v164
    %v200 = vpop.f32.mrb[0].mxu0
    %v201 = vadd.f32 %v115, %v200
    %v202 = vpop.f32.mrb[0].mxu0
    %v203 = vadd.f32 %v119, %v202
    %v204 = vpop.f32.mrb[0].mxu0
    %v205 = vadd.f32 %v115, %v204
    %v206 = vpop.f32.mrb[0].mxu0
    %v207 = vadd.f32 %v119, %v206
    %208 = vdwg.mxu0
    %v209 = vpack.c.bf16 %v205, %v201
    %v210 = vpack.c.bf16 %v207, %v203
    %v213 = vunpack.c.l.b16 %v209
    %v214 = vunpack.c.l.b16 %v210
    %v215 = vunpack.c.h.b16 %v209
    %v216 = vunpack.c.h.b16 %v210
    %v217 = vpack.c.b16 %v214, %v213
    %v218 = vpack.c.b16 %v216, %v215
    %v219 = vpack.c.b16 %v213, %v213
    %220 = vrot.lane.b32.xlu0 %v219, 64
    %v221 = vpop.permute.xlu0 %220
    %vm222 = vcmask 261120
    %v224 = vsel %vm222, %v217, 0
    %v227 = vsel %vm222, %v221, 0
    %229 = vmatprep.subr.bf16.mxu0 0
    %230 = vmatpush1.bf16.xpose.msra.mxu0 %v227
    %231 = vmatprep.subr.bf16.mxu0 0
    %232 = vmatpush1.bf16.xpose.msra.mxu0 0
    %233 = vmatprep.subr.bf16.mxu0 0
    %234 = vmatpush1.bf16.xpose.msra.mxu0 0
    %235 = vmatprep.subr.bf16.mxu0 0
    %236 = vmatpush1.bf16.xpose.msra.mxu0 0
    %237 = vmatprep.subr.bf16.mxu0 0
    %238 = vmatpush1.bf16.xpose.msra.mxu0 0
    %239 = vmatprep.subr.bf16.mxu0 0
    %240 = vmatpush1.bf16.xpose.msra.mxu0 0
    %241 = vmatprep.subr.bf16.mxu0 0
    %242 = vmatpush1.bf16.xpose.msra.mxu0 0
    %243 = vmatprep.subr.bf16.mxu0 0
    %244 = vmatpush1.bf16.xpose.msra.mxu0 0
    %245 = vmatprep.subr.bf16.mxu0 0
    %246 = vmatpush1.bf16.xpose.msra.mxu0 0
    %247 = vmatprep.subr.bf16.mxu0 0
    %248 = vmatpush1.bf16.xpose.msra.mxu0 0
    %249 = vmatprep.subr.bf16.mxu0 0
    %250 = vmatpush1.bf16.xpose.msra.mxu0 0
    %251 = vmatprep.subr.bf16.mxu0 0
    %252 = vmatpush1.bf16.xpose.msra.mxu0 0
    %253 = vmatprep.subr.bf16.mxu0 0
    %254 = vmatpush1.bf16.xpose.msra.mxu0 0
    %255 = vmatprep.subr.bf16.mxu0 0
    %256 = vmatpush1.bf16.xpose.msra.mxu0 0
    %257 = vmatprep.subr.bf16.mxu0 0
    %258 = vmatpush1.bf16.xpose.msra.mxu0 0
    %259 = vmatprep.subr.bf16.mxu0 0
    %260 = vmatpush1.bf16.xpose.msra.mxu0 0
    %261 = vmatprep.mubr.bf16.mxu0 0
    %262 = vmatmul.mubr.bf16.gmra.mrb[0].mxu0 %v224
    %v263 = vpop.f32.mrb[0].mxu0
    %v264 = vadd.f32 0.0, %v263
    %v265 = vpop.f32.mrb[0].mxu0
    %v266 = vpop.f32.mrb[0].mxu0
    %v267 = vpop.f32.mrb[0].mxu0
    %268 = vdwg.mxu0
    %v269 = vpack.c.b16 %v215, %v215
    %270 = vrot.lane.b32.xlu0 %v269, 64
    %v271 = vpop.permute.xlu0 %270
    %v273 = vsel %vm222, %v218, 0
    %v276 = vsel %vm222, %v271, 0
    %278 = vmatprep.subr.bf16.mxu0 0
    %279 = vmatpush1.bf16.xpose.msra.mxu0 %v276
    %280 = vmatprep.subr.bf16.mxu0 0
    %281 = vmatpush1.bf16.xpose.msra.mxu0 0
    %282 = vmatprep.subr.bf16.mxu0 0
    %283 = vmatpush1.bf16.xpose.msra.mxu0 0
    %284 = vmatprep.subr.bf16.mxu0 0
    %285 = vmatpush1.bf16.xpose.msra.mxu0 0
    %286 = vmatprep.subr.bf16.mxu0 0
    %287 = vmatpush1.bf16.xpose.msra.mxu0 0
    %288 = vmatprep.subr.bf16.mxu0 0
    %289 = vmatpush1.bf16.xpose.msra.mxu0 0
    %290 = vmatprep.subr.bf16.mxu0 0
    %291 = vmatpush1.bf16.xpose.msra.mxu0 0
    %292 = vmatprep.subr.bf16.mxu0 0
    %293 = vmatpush1.bf16.xpose.msra.mxu0 0
    %294 = vmatprep.subr.bf16.mxu0 0
    %295 = vmatpush1.bf16.xpose.msra.mxu0 0
    %296 = vmatprep.subr.bf16.mxu0 0
    %297 = vmatpush1.bf16.xpose.msra.mxu0 0
    %298 = vmatprep.subr.bf16.mxu0 0
    %299 = vmatpush1.bf16.xpose.msra.mxu0 0
    %300 = vmatprep.subr.bf16.mxu0 0
    %301 = vmatpush1.bf16.xpose.msra.mxu0 0
    %302 = vmatprep.subr.bf16.mxu0 0
    %303 = vmatpush1.bf16.xpose.msra.mxu0 0
    %304 = vmatprep.subr.bf16.mxu0 0
    %305 = vmatpush1.bf16.xpose.msra.mxu0 0
    %306 = vmatprep.subr.bf16.mxu0 0
    %307 = vmatpush1.bf16.xpose.msra.mxu0 0
    %308 = vmatprep.subr.bf16.mxu0 0
    %309 = vmatpush1.bf16.xpose.msra.mxu0 0
    %310 = vmatprep.mubr.bf16.mxu0 0
    %311 = vmatmul.mubr.bf16.gmra.mrb[0].mxu0 %v273
    %v312 = vpop.f32.mrb[0].mxu0
    %v313 = vadd.f32 0.0, %v312
    %v314 = vpop.f32.mrb[0].mxu0
    %v315 = vpop.f32.mrb[0].mxu0
    %v316 = vpop.f32.mrb[0].mxu0
    %317 = vdwg.mxu0
    %v318 = vmul.f32 %v264, 0.17677669
    %v319 = vmul.f32 %v313, 0.17677669
    %vm320 = vcmask 64512
    %v321 = vsel %vm320, %v318, -inf
    %322 = vmax.xlane.f32.xlu0 %v321
    %v323 = vpop.xlane.xlu0 %322
    %v324 = vsel %vm320, %v319, -inf
    %325 = vmax.xlane.f32.xlu0 %v324
    %v326 = vpop.xlane.xlu0 %325
    %v327 = vsub.f32 %v318, %v323
    %v328 = vsub.f32 %v319, %v326
    %v329 = vmul.f32 %v327, 1.442695
    %v330 = vpow.pop %v329
    %v331 = vmul.f32 %v328, 1.442695
    %v332 = vpow.pop %v331
    %v333 = vsel %vm320, %v330, 0.0
    %334 = vadd.xlane.f32.xlu0 %v333
    %v335 = vpop.xlane.xlu0 %334
    %v336 = vsel %vm320, %v332, 0.0
    %337 = vadd.xlane.f32.xlu0 %v336
    %v338 = vpop.xlane.xlu0 %337
    %v339 = vrcp.pop %v335
    %v340 = vrcp.pop %v338
    %v341 = vmul.f32 %v330, %v339
    %v342 = vmul.f32 %v332, %v340
    %v343 = vpack.c.bf16 %v341, %v341
    %v344 = vpack.c.bf16 %v342, %v342
    %v345 = vrot.slane %v217, 4
    %v347 = vsel %vm320, %v343, 0
    %vm349 = vcmask 1043456
    %v351 = vsel %vm349, %v345, 0
    %353 = vmatprep.subr.bf16.mxu0 0
    %354 = vmatpush1.bf16.msra.mxu0 %v351
    %355 = vmatprep.subr.bf16.mxu0 0
    %356 = vmatpush1.bf16.msra.mxu0 0
    %357 = vmatprep.subr.bf16.mxu0 0
    %358 = vmatpush1.bf16.msra.mxu0 0
    %359 = vmatprep.subr.bf16.mxu0 0
    %360 = vmatpush1.bf16.msra.mxu0 0
    %361 = vmatprep.subr.bf16.mxu0 0
    %362 = vmatpush1.bf16.msra.mxu0 0
    %363 = vmatprep.subr.bf16.mxu0 0
    %364 = vmatpush1.bf16.msra.mxu0 0
    %365 = vmatprep.subr.bf16.mxu0 0
    %366 = vmatpush1.bf16.msra.mxu0 0
    %367 = vmatprep.subr.bf16.mxu0 0
    %368 = vmatpush1.bf16.msra.mxu0 0
    %369 = vmatprep.subr.bf16.mxu0 0
    %370 = vmatpush1.bf16.msra.mxu0 0
    %371 = vmatprep.subr.bf16.mxu0 0
    %372 = vmatpush1.bf16.msra.mxu0 0
    %373 = vmatprep.subr.bf16.mxu0 0
    %374 = vmatpush1.bf16.msra.mxu0 0
    %375 = vmatprep.subr.bf16.mxu0 0
    %376 = vmatpush1.bf16.msra.mxu0 0
    %377 = vmatprep.subr.bf16.mxu0 0
    %378 = vmatpush1.bf16.msra.mxu0 0
    %379 = vmatprep.subr.bf16.mxu0 0
    %380 = vmatpush1.bf16.msra.mxu0 0
    %381 = vmatprep.subr.bf16.mxu0 0
    %382 = vmatpush1.bf16.msra.mxu0 0
    %383 = vmatprep.subr.bf16.mxu0 0
    %384 = vmatpush1.bf16.msra.mxu0 0
    %385 = vmatprep.mubr.bf16.mxu0 0
    %386 = vmatmul.mubr.bf16.gmra.mrb[0].mxu0 %v347
    %v387 = vpop.f32.mrb[0].mxu0
    %v388 = vadd.f32 0.0, %v387
    %v389 = vpop.f32.mrb[0].mxu0
    %v390 = vpop.f32.mrb[0].mxu0
    %v391 = vpop.f32.mrb[0].mxu0
    %392 = vdwg.mxu0
    %v393 = vrot.slane %v218, 4
    %v395 = vsel %vm320, %v344, 0
    %v398 = vsel %vm349, %v393, 0
    %400 = vmatprep.subr.bf16.mxu0 0
    %401 = vmatpush1.bf16.msra.mxu0 %v398
    %402 = vmatprep.subr.bf16.mxu0 0
    %403 = vmatpush1.bf16.msra.mxu0 0
    %404 = vmatprep.subr.bf16.mxu0 0
    %405 = vmatpush1.bf16.msra.mxu0 0
    %406 = vmatprep.subr.bf16.mxu0 0
    %407 = vmatpush1.bf16.msra.mxu0 0
    %408 = vmatprep.subr.bf16.mxu0 0
    %409 = vmatpush1.bf16.msra.mxu0 0
    %410 = vmatprep.subr.bf16.mxu0 0
    %411 = vmatpush1.bf16.msra.mxu0 0
    %412 = vmatprep.subr.bf16.mxu0 0
    %413 = vmatpush1.bf16.msra.mxu0 0
    %414 = vmatprep.subr.bf16.mxu0 0
    %415 = vmatpush1.bf16.msra.mxu0 0
    %416 = vmatprep.subr.bf16.mxu0 0
    %417 = vmatpush1.bf16.msra.mxu0 0
    %418 = vmatprep.subr.bf16.mxu0 0
    %419 = vmatpush1.bf16.msra.mxu0 0
    %420 = vmatprep.subr.bf16.mxu0 0
    %421 = vmatpush1.bf16.msra.mxu0 0
    %422 = vmatprep.subr.bf16.mxu0 0
    %423 = vmatpush1.bf16.msra.mxu0 0
    %424 = vmatprep.subr.bf16.mxu0 0
    %425 = vmatpush1.bf16.msra.mxu0 0
    %426 = vmatprep.subr.bf16.mxu0 0
    %427 = vmatpush1.bf16.msra.mxu0 0
    %428 = vmatprep.subr.bf16.mxu0 0
    %429 = vmatpush1.bf16.msra.mxu0 0
    %430 = vmatprep.subr.bf16.mxu0 0
    %431 = vmatpush1.bf16.msra.mxu0 0
    %432 = vmatprep.mubr.bf16.mxu0 0
    %433 = vmatmul.mubr.bf16.gmra.mrb[0].mxu0 %v395
    %v434 = vpop.f32.mrb[0].mxu0
    %v435 = vadd.f32 0.0, %v434
    %v436 = vpop.f32.mrb[0].mxu0
    %v437 = vpop.f32.mrb[0].mxu0
    %v438 = vpop.f32.mrb[0].mxu0
    %439 = vdwg.mxu0
    %v440 = vpack.c.bf16 %v435, %v388
    %v441 = vld [vmem:[%s5] sm:$0xf]
    %v442 = vld [vmem:[%s5 + $0x4] sm:$0xf]
    %v443 = vld [vmem:[%s5 + $0x8] sm:$0xf]
    %v444 = vld [vmem:[%s5 + $0xc] sm:$0xf]
    %445 = vrot.lane.b32.xlu0 %v219, 96
    %v446 = vpop.permute.xlu0 %445
    %447 = vrot.lane.b32.xlu0 %v219, 32
    %v448 = vpop.permute.xlu0 %447
    %v450 = vsel %vm222, %v446, 0
    %v453 = vsel %vm222, %v448, 0
    %455 = vmatprep.subr.bf16.mxu0 0
    %456 = vmatpush1.bf16.xpose.msra.mxu0 %v453
    %457 = vmatprep.subr.bf16.mxu0 0
    %458 = vmatpush1.bf16.xpose.msra.mxu0 0
    %459 = vmatprep.subr.bf16.mxu0 0
    %460 = vmatpush1.bf16.xpose.msra.mxu0 0
    %461 = vmatprep.subr.bf16.mxu0 0
    %462 = vmatpush1.bf16.xpose.msra.mxu0 0
    %463 = vmatprep.subr.bf16.mxu0 0
    %464 = vmatpush1.bf16.xpose.msra.mxu0 0
    %465 = vmatprep.subr.bf16.mxu0 0
    %466 = vmatpush1.bf16.xpose.msra.mxu0 0
    %467 = vmatprep.subr.bf16.mxu0 0
    %468 = vmatpush1.bf16.xpose.msra.mxu0 0
    %469 = vmatprep.subr.bf16.mxu0 0
    %470 = vmatpush1.bf16.xpose.msra.mxu0 0
    %471 = vmatprep.subr.bf16.mxu0 0
    %472 = vmatpush1.bf16.xpose.msra.mxu0 0
    %473 = vmatprep.subr.bf16.mxu0 0
    %474 = vmatpush1.bf16.xpose.msra.mxu0 0
    %475 = vmatprep.subr.bf16.mxu0 0
    %476 = vmatpush1.bf16.xpose.msra.mxu0 0
    %477 = vmatprep.subr.bf16.mxu0 0
    %478 = vmatpush1.bf16.xpose.msra.mxu0 0
    %479 = vmatprep.subr.bf16.mxu0 0
    %480 = vmatpush1.bf16.xpose.msra.mxu0 0
    %481 = vmatprep.subr.bf16.mxu0 0
    %482 = vmatpush1.bf16.xpose.msra.mxu0 0
    %483 = vmatprep.subr.bf16.mxu0 0
    %484 = vmatpush1.bf16.xpose.msra.mxu0 0
    %485 = vmatprep.subr.bf16.mxu0 0
    %486 = vmatpush1.bf16.xpose.msra.mxu0 0
    %487 = vmatprep.mubr.bf16.mxu0 0
    %488 = vmatmul.mubr.bf16.gmra.mrb[0].mxu0 %v450
    %v489 = vpop.f32.mrb[0].mxu0
    %v490 = vadd.f32 0.0, %v489
    %v491 = vpop.f32.mrb[0].mxu0
    %v492 = vpop.f32.mrb[0].mxu0
    %v493 = vpop.f32.mrb[0].mxu0
    %494 = vdwg.mxu0
    %495 = vrot.lane.b32.xlu0 %v269, 96
    %v496 = vpop.permute.xlu0 %495
    %497 = vrot.lane.b32.xlu0 %v269, 32
    %v498 = vpop.permute.xlu0 %497
    %v500 = vsel %vm222, %v496, 0
    %v503 = vsel %vm222, %v498, 0
    %505 = vmatprep.subr.bf16.mxu0 0
    %506 = vmatpush1.bf16.xpose.msra.mxu0 %v503
    %507 = vmatprep.subr.bf16.mxu0 0
    %508 = vmatpush1.bf16.xpose.msra.mxu0 0
    %509 = vmatprep.subr.bf16.mxu0 0
    %510 = vmatpush1.bf16.xpose.msra.mxu0 0
    %511 = vmatprep.subr.bf16.mxu0 0
    %512 = vmatpush1.bf16.xpose.msra.mxu0 0
    %513 = vmatprep.subr.bf16.mxu0 0
    %514 = vmatpush1.bf16.xpose.msra.mxu0 0
    %515 = vmatprep.subr.bf16.mxu0 0
    %516 = vmatpush1.bf16.xpose.msra.mxu0 0
    %517 = vmatprep.subr.bf16.mxu0 0
    %518 = vmatpush1.bf16.xpose.msra.mxu0 0
    %519 = vmatprep.subr.bf16.mxu0 0
    %520 = vmatpush1.bf16.xpose.msra.mxu0 0
    %521 = vmatprep.subr.bf16.mxu0 0
    %522 = vmatpush1.bf16.xpose.msra.mxu0 0
    %523 = vmatprep.subr.bf16.mxu0 0
    %524 = vmatpush1.bf16.xpose.msra.mxu0 0
    %525 = vmatprep.subr.bf16.mxu0 0
    %526 = vmatpush1.bf16.xpose.msra.mxu0 0
    %527 = vmatprep.subr.bf16.mxu0 0
    %528 = vmatpush1.bf16.xpose.msra.mxu0 0
    %529 = vmatprep.subr.bf16.mxu0 0
    %530 = vmatpush1.bf16.xpose.msra.mxu0 0
    %531 = vmatprep.subr.bf16.mxu0 0
    %532 = vmatpush1.bf16.xpose.msra.mxu0 0
    %533 = vmatprep.subr.bf16.mxu0 0
    %534 = vmatpush1.bf16.xpose.msra.mxu0 0
    %535 = vmatprep.subr.bf16.mxu0 0
    %536 = vmatpush1.bf16.xpose.msra.mxu0 0
    %537 = vmatprep.mubr.bf16.mxu0 0
    %538 = vmatmul.mubr.bf16.gmra.mrb[0].mxu0 %v500
    %v539 = vpop.f32.mrb[0].mxu0
    %v540 = vadd.f32 0.0, %v539
    %v541 = vpop.f32.mrb[0].mxu0
    %v542 = vpop.f32.mrb[0].mxu0
    %v543 = vpop.f32.mrb[0].mxu0
    %544 = vdwg.mxu0
    %v545 = vmul.f32 %v490, 0.17677669
    %v546 = vmul.f32 %v540, 0.17677669
    %v547 = vsel %vm320, %v545, -inf
    %548 = vmax.xlane.f32.xlu0 %v547
    %v549 = vpop.xlane.xlu0 %548
    %v550 = vsel %vm320, %v546, -inf
    %551 = vmax.xlane.f32.xlu0 %v550
    %v552 = vpop.xlane.xlu0 %551
    %v553 = vsub.f32 %v545, %v549
    %v554 = vsub.f32 %v546, %v552
    %v555 = vmul.f32 %v553, 1.442695
    %v556 = vpow.pop %v555
    %v557 = vmul.f32 %v554, 1.442695
    %v558 = vpow.pop %v557
    %v559 = vsel %vm320, %v556, 0.0
    %560 = vadd.xlane.f32.xlu0 %v559
    %v561 = vpop.xlane.xlu0 %560
    %v562 = vsel %vm320, %v558, 0.0
    %563 = vadd.xlane.f32.xlu0 %v562
    %v564 = vpop.xlane.xlu0 %563
    %v565 = vrcp.pop %v561
    %v566 = vrcp.pop %v564
    %v567 = vmul.f32 %v556, %v565
    %v568 = vmul.f32 %v558, %v566
    %v569 = vpack.c.bf16 %v567, %v567
    %v570 = vpack.c.bf16 %v568, %v568
    %571 = vrot.lane.b32.xlu0 %v217, 96
    %v572 = vpop.permute.xlu0 %571
    %v573 = vrot.slane %v572, 4
    %v575 = vsel %vm320, %v569, 0
    %v578 = vsel %vm349, %v573, 0
    %580 = vmatprep.subr.bf16.mxu0 0
    %581 = vmatpush1.bf16.msra.mxu0 %v578
    %582 = vmatprep.subr.bf16.mxu0 0
    %583 = vmatpush1.bf16.msra.mxu0 0
    %584 = vmatprep.subr.bf16.mxu0 0
    %585 = vmatpush1.bf16.msra.mxu0 0
    %586 = vmatprep.subr.bf16.mxu0 0
    %587 = vmatpush1.bf16.msra.mxu0 0
    %588 = vmatprep.subr.bf16.mxu0 0
    %589 = vmatpush1.bf16.msra.mxu0 0
    %590 = vmatprep.subr.bf16.mxu0 0
    %591 = vmatpush1.bf16.msra.mxu0 0
    %592 = vmatprep.subr.bf16.mxu0 0
    %593 = vmatpush1.bf16.msra.mxu0 0
    %594 = vmatprep.subr.bf16.mxu0 0
    %595 = vmatpush1.bf16.msra.mxu0 0
    %596 = vmatprep.subr.bf16.mxu0 0
    %597 = vmatpush1.bf16.msra.mxu0 0
    %598 = vmatprep.subr.bf16.mxu0 0
    %599 = vmatpush1.bf16.msra.mxu0 0
    %600 = vmatprep.subr.bf16.mxu0 0
    %601 = vmatpush1.bf16.msra.mxu0 0
    %602 = vmatprep.subr.bf16.mxu0 0
    %603 = vmatpush1.bf16.msra.mxu0 0
    %604 = vmatprep.subr.bf16.mxu0 0
    %605 = vmatpush1.bf16.msra.mxu0 0
    %606 = vmatprep.subr.bf16.mxu0 0
    %607 = vmatpush1.bf16.msra.mxu0 0
    %608 = vmatprep.subr.bf16.mxu0 0
    %609 = vmatpush1.bf16.msra.mxu0 0
    %610 = vmatprep.subr.bf16.mxu0 0
    %611 = vmatpush1.bf16.msra.mxu0 0
    %612 = vmatprep.mubr.bf16.mxu0 0
    %613 = vmatmul.mubr.bf16.gmra.mrb[0].mxu0 %v575
    %v614 = vpop.f32.mrb[0].mxu0
    %v615 = vadd.f32 0.0, %v614
    %v616 = vpop.f32.mrb[0].mxu0
    %v617 = vpop.f32.mrb[0].mxu0
    %v618 = vpop.f32.mrb[0].mxu0
    %619 = vdwg.mxu0
    %620 = vrot.lane.b32.xlu0 %v218, 96
    %v621 = vpop.permute.xlu0 %620
    %v622 = vrot.slane %v621, 4
    %v624 = vsel %vm320, %v570, 0
    %v627 = vsel %vm349, %v622, 0
    %629 = vmatprep.subr.bf16.mxu0 0
    %630 = vmatpush1.bf16.msra.mxu0 %v627
    %631 = vmatprep.subr.bf16.mxu0 0
    %632 = vmatpush1.bf16.msra.mxu0 0
    %633 = vmatprep.subr.bf16.mxu0 0
    %634 = vmatpush1.bf16.msra.mxu0 0
    %635 = vmatprep.subr.bf16.mxu0 0
    %636 = vmatpush1.bf16.msra.mxu0 0
    %637 = vmatprep.subr.bf16.mxu0 0
    %638 = vmatpush1.bf16.msra.mxu0 0
    %639 = vmatprep.subr.bf16.mxu0 0
    %640 = vmatpush1.bf16.msra.mxu0 0
    %641 = vmatprep.subr.bf16.mxu0 0
    %642 = vmatpush1.bf16.msra.mxu0 0
    %643 = vmatprep.subr.bf16.mxu0 0
    %644 = vmatpush1.bf16.msra.mxu0 0
    %645 = vmatprep.subr.bf16.mxu0 0
    %646 = vmatpush1.bf16.msra.mxu0 0
    %647 = vmatprep.subr.bf16.mxu0 0
    %648 = vmatpush1.bf16.msra.mxu0 0
    %649 = vmatprep.subr.bf16.mxu0 0
    %650 = vmatpush1.bf16.msra.mxu0 0
    %651 = vmatprep.subr.bf16.mxu0 0
    %652 = vmatpush1.bf16.msra.mxu0 0
    %653 = vmatprep.subr.bf16.mxu0 0
    %654 = vmatpush1.bf16.msra.mxu0 0
    %655 = vmatprep.subr.bf16.mxu0 0
    %656 = vmatpush1.bf16.msra.mxu0 0
    %657 = vmatprep.subr.bf16.mxu0 0
    %658 = vmatpush1.bf16.msra.mxu0 0
    %659 = vmatprep.subr.bf16.mxu0 0
    %660 = vmatpush1.bf16.msra.mxu0 0
    %661 = vmatprep.mubr.bf16.mxu0 0
    %662 = vmatmul.mubr.bf16.gmra.mrb[0].mxu0 %v624
    %v663 = vpop.f32.mrb[0].mxu0
    %v664 = vadd.f32 0.0, %v663
    %v665 = vpop.f32.mrb[0].mxu0
    %v666 = vpop.f32.mrb[0].mxu0
    %v667 = vpop.f32.mrb[0].mxu0
    %668 = vdwg.mxu0
    %v669 = vpack.c.bf16 %v664, %v615
    %v670 = vld [vmem:[%s5 + $0x10] sm:$0xf]
    %v671 = vld [vmem:[%s5 + $0x14] sm:$0xf]
    %v672 = vld [vmem:[%s5 + $0x18] sm:$0xf]
    %v673 = vld [vmem:[%s5 + $0x1c] sm:$0xf]
    %v678 = vunpack.c.l.b16 %v670
    %v679 = vunpack.c.l.b16 %v671
    %v680 = vunpack.c.l.b16 %v672
    %v681 = vunpack.c.l.b16 %v673
    %v682 = vpack.c.b16 %v679, %v678
    %v683 = vpack.c.b16 %v681, %v680
    %v687 = vsel %vm222, %v669, 0
    %689 = vmatprep.subr.bf16.mxu0 0
    %690 = vmatpush1.bf16.msra.mxu0 %v682
    %691 = vmatprep.subr.bf16.mxu0 0
    %692 = vmatpush1.bf16.msra.mxu0 %v683
    %693 = vmatprep.subr.bf16.mxu0 0
    %694 = vmatpush1.bf16.msra.mxu0 0
    %695 = vmatprep.subr.bf16.mxu0 0
    %696 = vmatpush1.bf16.msra.mxu0 0
    %697 = vmatprep.subr.bf16.mxu0 0
    %698 = vmatpush1.bf16.msra.mxu0 0
    %699 = vmatprep.subr.bf16.mxu0 0
    %700 = vmatpush1.bf16.msra.mxu0 0
    %701 = vmatprep.subr.bf16.mxu0 0
    %702 = vmatpush1.bf16.msra.mxu0 0
    %703 = vmatprep.subr.bf16.mxu0 0
    %704 = vmatpush1.bf16.msra.mxu0 0
    %705 = vmatprep.subr.bf16.mxu0 0
    %706 = vmatpush1.bf16.msra.mxu0 0
    %707 = vmatprep.subr.bf16.mxu0 0
    %708 = vmatpush1.bf16.msra.mxu0 0
    %709 = vmatprep.subr.bf16.mxu0 0
    %710 = vmatpush1.bf16.msra.mxu0 0
    %711 = vmatprep.subr.bf16.mxu0 0
    %712 = vmatpush1.bf16.msra.mxu0 0
    %713 = vmatprep.subr.bf16.mxu0 0
    %714 = vmatpush1.bf16.msra.mxu0 0
    %715 = vmatprep.subr.bf16.mxu0 0
    %716 = vmatpush1.bf16.msra.mxu0 0
    %717 = vmatprep.subr.bf16.mxu0 0
    %718 = vmatpush1.bf16.msra.mxu0 0
    %719 = vmatprep.subr.bf16.mxu0 0
    %720 = vmatpush1.bf16.msra.mxu0 0
    %721 = vmatprep.mubr.bf16.mxu0 0
    %722 = vmatmul.mubr.bf16.gmra.mrb[0].mxu0 %v687
    %v723 = vpop.f32.mrb[0].mxu0
    %v724 = vadd.f32 0.0, %v723
    %v725 = vpop.f32.mrb[0].mxu0
    %v726 = vpop.f32.mrb[0].mxu0
    %v727 = vadd.f32 0.0, %v726
    %v728 = vpop.f32.mrb[0].mxu0
    %729 = vdwg.mxu0
    %v734 = vunpack.c.l.b16 %v441
    %v735 = vunpack.c.l.b16 %v442
    %v736 = vunpack.c.l.b16 %v443
    %v737 = vunpack.c.l.b16 %v444
    %v738 = vpack.c.b16 %v735, %v734
    %v739 = vpack.c.b16 %v737, %v736
    %v743 = vsel %vm222, %v440, 0
    %745 = vmatprep.subr.bf16.mxu0 0
    %746 = vmatpush1.bf16.msra.mxu0 %v738
    %747 = vmatprep.subr.bf16.mxu0 0
    %748 = vmatpush1.bf16.msra.mxu0 %v739
    %749 = vmatprep.subr.bf16.mxu0 0
    %750 = vmatpush1.bf16.msra.mxu0 0
    %751 = vmatprep.subr.bf16.mxu0 0
    %752 = vmatpush1.bf16.msra.mxu0 0
    %753 = vmatprep.subr.bf16.mxu0 0
    %754 = vmatpush1.bf16.msra.mxu0 0
    %755 = vmatprep.subr.bf16.mxu0 0
    %756 = vmatpush1.bf16.msra.mxu0 0
    %757 = vmatprep.subr.bf16.mxu0 0
    %758 = vmatpush1.bf16.msra.mxu0 0
    %759 = vmatprep.subr.bf16.mxu0 0
    %760 = vmatpush1.bf16.msra.mxu0 0
    %761 = vmatprep.subr.bf16.mxu0 0
    %762 = vmatpush1.bf16.msra.mxu0 0
    %763 = vmatprep.subr.bf16.mxu0 0
    %764 = vmatpush1.bf16.msra.mxu0 0
    %765 = vmatprep.subr.bf16.mxu0 0
    %766 = vmatpush1.bf16.msra.mxu0 0
    %767 = vmatprep.subr.bf16.mxu0 0
    %768 = vmatpush1.bf16.msra.mxu0 0
    %769 = vmatprep.subr.bf16.mxu0 0
    %770 = vmatpush1.bf16.msra.mxu0 0
    %771 = vmatprep.subr.bf16.mxu0 0
    %772 = vmatpush1.bf16.msra.mxu0 0
    %773 = vmatprep.subr.bf16.mxu0 0
    %774 = vmatpush1.bf16.msra.mxu0 0
    %775 = vmatprep.subr.bf16.mxu0 0
    %776 = vmatpush1.bf16.msra.mxu0 0
    %777 = vmatprep.mubr.bf16.mxu0 0
    %778 = vmatmul.mubr.bf16.gmra.mrb[0].mxu0 %v743
    %v779 = vpop.f32.mrb[0].mxu0
    %v780 = vadd.f32 %v724, %v779
    %v781 = vpop.f32.mrb[0].mxu0
    %v782 = vpop.f32.mrb[0].mxu0
    %v783 = vadd.f32 %v727, %v782
    %v784 = vpop.f32.mrb[0].mxu0
    %785 = vdwg.mxu0
    %v786 = vlaneseq
    %v787 = vshrl.u32 %v786, 7
    %v788 = vsub.s32 1, %v787
    %v789 = vrot.slane %v54, %v788
    %v790 = vadd.f32 %v780, %v789
    %v791 = vadd.f32 %v783, %v789
    %v792 = vadd.f32 %v99, %v790
    %v793 = vadd.f32 %v100, %v791
    %v794 = vsel %vm162, %v792, 0.0
    %795 = vadd.xlane.f32.xlu0 %v794
    %v796 = vpop.xlane.xlu0 %795
    %v797 = vsel %vm162, %v793, 0.0
    %798 = vadd.xlane.f32.xlu0 %v797
    %v799 = vpop.xlane.xlu0 %798
    %v800 = vrcp.pop 64.0
    %v801 = vmul.f32 %v796, %v800
    %v802 = vmul.f32 %v799, %v800
    %v803 = vsub.f32 %v792, %v801
    %v804 = vsub.f32 %v793, %v802
    %v805 = vmul.f32 %v803, %v803
    %v806 = vmul.f32 %v804, %v804
    %v807 = vsel %vm162, %v805, 0.0
    %808 = vadd.xlane.f32.xlu0 %v807
    %v809 = vpop.xlane.xlu0 %808
    %v810 = vsel %vm162, %v806, 0.0
    %811 = vadd.xlane.f32.xlu0 %v810
    %v812 = vpop.xlane.xlu0 %811
    %v813 = vmul.f32 %v809, %v800
    %v814 = vmul.f32 %v812, %v800
    %v815 = vadd.f32 %v813, 1e-05
    %v816 = vadd.f32 %v814, 1e-05
    %v817 = vrsqrt.pop %v815
    %v818 = vrsqrt.pop %v816
    %v819 = vmul.f32 %v803, %v817
    %v820 = vmul.f32 %v804, %v818
    %v821 = vlaneseq
    %v822 = vshrl.u32 %v821, 7
    %v823 = vsub.s32 2, %v822
    %v824 = vrot.slane %v54, %v823
    %v825 = vmul.f32 %v819, %v824
    %v826 = vmul.f32 %v820, %v824
    %v827 = vlaneseq
    %v828 = vshrl.u32 %v827, 7
    %v829 = vsub.s32 3, %v828
    %v830 = vrot.slane %v54, %v829
    %v831 = vadd.f32 %v825, %v830
    %v832 = vadd.f32 %v826, %v830
    %v833 = vpack.c.bf16 %v832, %v831
    %v834 = vld [vmem:[%s6] sm:$0xff]
    %v835 = vld [vmem:[%s6 + $0x8] sm:$0xff]
    %v836 = vld [vmem:[%s6 + $0x10] sm:$0xff]
    %v837 = vld [vmem:[%s6 + $0x18] sm:$0xff]
    %v838 = vld [vmem:[%s6 + $0x20] sm:$0xff]
    %v839 = vld [vmem:[%s6 + $0x28] sm:$0xff]
    %v840 = vld [vmem:[%s6 + $0x30] sm:$0xff]
    %v841 = vld [vmem:[%s6 + $0x38] sm:$0xff]
    %v842 = vld [vmem:[#allocation2] sm:$0x3]
    %v844 = vlaneseq
    %v845 = vshrl.u32 %v844, 7
    %v846 = vsub.s32 0, %v845
    %v847 = vrot.slane %v842, %v846
    %v848 = vlaneseq
    %v849 = vshrl.u32 %v848, 7
    %v850 = vsub.s32 1, %v849
    %v851 = vrot.slane %v842, %v850
    %v862 = vunpack.c.l.b16 %v834
    %v863 = vunpack.c.h.b16 %v834
    %v864 = vunpack.c.l.b16 %v835
    %v865 = vunpack.c.h.b16 %v835
    %v866 = vunpack.c.l.b16 %v836
    %v867 = vunpack.c.h.b16 %v836
    %v868 = vunpack.c.l.b16 %v837
    %v869 = vunpack.c.h.b16 %v837
    %v870 = vunpack.c.l.b16 %v838
    %v871 = vunpack.c.h.b16 %v838
    %v872 = vunpack.c.l.b16 %v839
    %v873 = vunpack.c.h.b16 %v839
    %v874 = vunpack.c.l.b16 %v840
    %v875 = vunpack.c.h.b16 %v840
    %v876 = vunpack.c.l.b16 %v841
    %v877 = vunpack.c.h.b16 %v841
    %v878 = vpack.c.b16 %v864, %v862
    %v879 = vpack.c.b16 %v865, %v863
    %v880 = vpack.c.b16 %v868, %v866
    %v881 = vpack.c.b16 %v869, %v867
    %v882 = vpack.c.b16 %v872, %v870
    %v883 = vpack.c.b16 %v873, %v871
    %v884 = vpack.c.b16 %v876, %v874
    %v885 = vpack.c.b16 %v877, %v875
    %v895 = vsel %vm162, %v833, 0
    %897 = vmatprep.subr.bf16.mxu0 %v879
    %898 = vmatpush1.bf16.msra.mxu0 %v878
    %899 = vmatprep.subr.bf16.mxu0 %v881
    %900 = vmatpush1.bf16.msra.mxu0 %v880
    %901 = vmatprep.subr.bf16.mxu0 %v883
    %902 = vmatpush1.bf16.msra.mxu0 %v882
    %903 = vmatprep.subr.bf16.mxu0 %v885
    %904 = vmatpush1.bf16.msra.mxu0 %v884
    %905 = vmatprep.subr.bf16.mxu0 0
    %906 = vmatpush1.bf16.msra.mxu0 0
    %907 = vmatprep.subr.bf16.mxu0 0
    %908 = vmatpush1.bf16.msra.mxu0 0
    %909 = vmatprep.subr.bf16.mxu0 0
    %910 = vmatpush1.bf16.msra.mxu0 0
    %911 = vmatprep.subr.bf16.mxu0 0
    %912 = vmatpush1.bf16.msra.mxu0 0
    %913 = vmatprep.subr.bf16.mxu0 0
    %914 = vmatpush1.bf16.msra.mxu0 0
    %915 = vmatprep.subr.bf16.mxu0 0
    %916 = vmatpush1.bf16.msra.mxu0 0
    %917 = vmatprep.subr.bf16.mxu0 0
    %918 = vmatpush1.bf16.msra.mxu0 0
    %919 = vmatprep.subr.bf16.mxu0 0
    %920 = vmatpush1.bf16.msra.mxu0 0
    %921 = vmatprep.subr.bf16.mxu0 0
    %922 = vmatpush1.bf16.msra.mxu0 0
    %923 = vmatprep.subr.bf16.mxu0 0
    %924 = vmatpush1.bf16.msra.mxu0 0
    %925 = vmatprep.subr.bf16.mxu0 0
    %926 = vmatpush1.bf16.msra.mxu0 0
    %927 = vmatprep.subr.bf16.mxu0 0
    %928 = vmatpush1.bf16.msra.mxu0 0
    %929 = vmatprep.mubr.bf16.mxu0 0
    %930 = vmatmul.mubr.bf16.gmra.mrb[0].mxu0 %v895
    %v931 = vpop.f32.mrb[0].mxu0
    %v932 = vadd.f32 %v847, %v931
    %v933 = vpop.f32.mrb[0].mxu0
    %v934 = vadd.f32 %v851, %v933
    %v935 = vpop.f32.mrb[0].mxu0
    %v936 = vadd.f32 %v847, %v935
    %v937 = vpop.f32.mrb[0].mxu0
    %v938 = vadd.f32 %v851, %v937
    %939 = vdwg.mxu0
    %v940 = vmax.f32 %v932, 0.0
    %v941 = vmax.f32 %v934, 0.0
    %v942 = vmax.f32 %v936, 0.0
    %v943 = vmax.f32 %v938, 0.0
    %v944 = vpack.c.bf16 %v942, %v940
    %v945 = vpack.c.bf16 %v943, %v941
    %v946 = vld [vmem:[%s8] sm:$0xf]
    %v947 = vld [vmem:[%s8 + $0x4] sm:$0xf]
    %v948 = vld [vmem:[%s8 + $0x8] sm:$0xf]
    %v949 = vld [vmem:[%s8 + $0xc] sm:$0xf]
    %v950 = vld [vmem:[%s8 + $0x10] sm:$0xf]
    %v951 = vld [vmem:[%s8 + $0x14] sm:$0xf]
    %v952 = vld [vmem:[%s8 + $0x18] sm:$0xf]
    %v953 = vld [vmem:[%s8 + $0x1c] sm:$0xf]
    %v954 = vld [vmem:[%s8 + $0x20] sm:$0xf]
    %v955 = vld [vmem:[%s8 + $0x24] sm:$0xf]
    %v956 = vld [vmem:[%s8 + $0x28] sm:$0xf]
    %v957 = vld [vmem:[%s8 + $0x2c] sm:$0xf]
    %v958 = vld [vmem:[%s8 + $0x30] sm:$0xf]
    %v959 = vld [vmem:[%s8 + $0x34] sm:$0xf]
    %v960 = vld [vmem:[%s8 + $0x38] sm:$0xf]
    %v961 = vld [vmem:[%s8 + $0x3c] sm:$0xf]
    %v962 = vld [vmem:[%s8 + $0x40] sm:$0xf]
    %v963 = vld [vmem:[%s8 + $0x44] sm:$0xf]
    %v964 = vld [vmem:[%s8 + $0x48] sm:$0xf]
    %v965 = vld [vmem:[%s8 + $0x4c] sm:$0xf]
    %v966 = vld [vmem:[%s8 + $0x50] sm:$0xf]
    %v967 = vld [vmem:[%s8 + $0x54] sm:$0xf]
    %v968 = vld [vmem:[%s8 + $0x58] sm:$0xf]
    %v969 = vld [vmem:[%s8 + $0x5c] sm:$0xf]
    %v970 = vld [vmem:[%s8 + $0x60] sm:$0xf]
    %v971 = vld [vmem:[%s8 + $0x64] sm:$0xf]
    %v972 = vld [vmem:[%s8 + $0x68] sm:$0xf]
    %v973 = vld [vmem:[%s8 + $0x6c] sm:$0xf]
    %v974 = vld [vmem:[%s8 + $0x70] sm:$0xf]
    %v975 = vld [vmem:[%s8 + $0x74] sm:$0xf]
    %v976 = vld [vmem:[%s8 + $0x78] sm:$0xf]
    %v977 = vld [vmem:[%s8 + $0x7c] sm:$0xf]
    %v978 = vlaneseq
    %v979 = vshrl.u32 %v978, 7
    %v980 = vsub.s32 4, %v979
    %v981 = vrot.slane %v54, %v980
    %v1014 = vunpack.c.l.b16 %v946
    %v1015 = vunpack.c.l.b16 %v947
    %v1016 = vunpack.c.l.b16 %v948
    %v1017 = vunpack.c.l.b16 %v949
    %v1018 = vunpack.c.l.b16 %v950
    %v1019 = vunpack.c.l.b16 %v951
    %v1020 = vunpack.c.l.b16 %v952
    %v1021 = vunpack.c.l.b16 %v953
    %v1022 = vunpack.c.l.b16 %v954
    %v1023 = vunpack.c.l.b16 %v955
    %v1024 = vunpack.c.l.b16 %v956
    %v1025 = vunpack.c.l.b16 %v957
    %v1026 = vunpack.c.l.b16 %v958
    %v1027 = vunpack.c.l.b16 %v959
    %v1028 = vunpack.c.l.b16 %v960
    %v1029 = vunpack.c.l.b16 %v961
    %v1030 = vunpack.c.l.b16 %v962
    %v1031 = vunpack.c.l.b16 %v963
    %v1032 = vunpack.c.l.b16 %v964
    %v1033 = vunpack.c.l.b16 %v965
    %v1034 = vunpack.c.l.b16 %v966
    %v1035 = vunpack.c.l.b16 %v967
    %v1036 = vunpack.c.l.b16 %v968
    %v1037 = vunpack.c.l.b16 %v969
    %v1038 = vunpack.c.l.b16 %v970
    %v1039 = vunpack.c.l.b16 %v971
    %v1040 = vunpack.c.l.b16 %v972
    %v1041 = vunpack.c.l.b16 %v973
    %v1042 = vunpack.c.l.b16 %v974
    %v1043 = vunpack.c.l.b16 %v975
    %v1044 = vunpack.c.l.b16 %v976
    %v1045 = vunpack.c.l.b16 %v977
    %v1046 = vpack.c.b16 %v1015, %v1014
    %v1047 = vpack.c.b16 %v1017, %v1016
    %v1048 = vpack.c.b16 %v1019, %v1018
    %v1049 = vpack.c.b16 %v1021, %v1020
    %v1050 = vpack.c.b16 %v1023, %v1022
    %v1051 = vpack.c.b16 %v1025, %v1024
    %v1052 = vpack.c.b16 %v1027, %v1026
    %v1053 = vpack.c.b16 %v1029, %v1028
    %v1054 = vpack.c.b16 %v1031, %v1030
    %v1055 = vpack.c.b16 %v1033, %v1032
    %v1056 = vpack.c.b16 %v1035, %v1034
    %v1057 = vpack.c.b16 %v1037, %v1036
    %v1058 = vpack.c.b16 %v1039, %v1038
    %v1059 = vpack.c.b16 %v1041, %v1040
    %v1060 = vpack.c.b16 %v1043, %v1042
    %v1061 = vpack.c.b16 %v1045, %v1044
    %1078 = vmatprep.subr.bf16.mxu0 0
    %1079 = vmatpush1.bf16.msra.mxu0 %v1046
    %1080 = vmatprep.subr.bf16.mxu0 0
    %1081 = vmatpush1.bf16.msra.mxu0 %v1047
    %1082 = vmatprep.subr.bf16.mxu0 0
    %1083 = vmatpush1.bf16.msra.mxu0 %v1048
    %1084 = vmatprep.subr.bf16.mxu0 0
    %1085 = vmatpush1.bf16.msra.mxu0 %v1049
    %1086 = vmatprep.subr.bf16.mxu0 0
    %1087 = vmatpush1.bf16.msra.mxu0 %v1050
    %1088 = vmatprep.subr.bf16.mxu0 0
    %1089 = vmatpush1.bf16.msra.mxu0 %v1051
    %1090 = vmatprep.subr.bf16.mxu0 0
    %1091 = vmatpush1.bf16.msra.mxu0 %v1052
    %1092 = vmatprep.subr.bf16.mxu0 0
    %1093 = vmatpush1.bf16.msra.mxu0 %v1053
    %1094 = vmatprep.subr.bf16.mxu0 0
    %1095 = vmatpush1.bf16.msra.mxu0 %v1054
    %1096 = vmatprep.subr.bf16.mxu0 0
    %1097 = vmatpush1.bf16.msra.mxu0 %v1055
    %1098 = vmatprep.subr.bf16.mxu0 0
    %1099 = vmatpush1.bf16.msra.mxu0 %v1056
    %1100 = vmatprep.subr.bf16.mxu0 0
    %1101 = vmatpush1.bf16.msra.mxu0 %v1057
    %1102 = vmatprep.subr.bf16.mxu0 0
    %1103 = vmatpush1.bf16.msra.mxu0 %v1058
    %1104 = vmatprep.subr.bf16.mxu0 0
    %1105 = vmatpush1.bf16.msra.mxu0 %v1059
    %1106 = vmatprep.subr.bf16.mxu0 0
    %1107 = vmatpush1.bf16.msra.mxu0 %v1060
    %1108 = vmatprep.subr.bf16.mxu0 0
    %1109 = vmatpush1.bf16.msra.mxu0 %v1061
    %1110 = vmatprep.mubr.bf16.mxu0 %v945
    %1111 = vmatmul.mubr.bf16.gmra.mrb[0].mxu0 %v944
    %v1112 = vpop.f32.mrb[0].mxu0
    %v1113 = vadd.f32 %v981, %v1112
    %v1114 = vpop.f32.mrb[0].mxu0
    %v1115 = vpop.f32.mrb[0].mxu0
    %v1116 = vadd.f32 %v981, %v1115
    %v1117 = vpop.f32.mrb[0].mxu0
    %1118 = vdwg.mxu0
    %v1119 = vadd.f32 %v831, %v1113
    %v1120 = vadd.f32 %v832, %v1116
    %v1121 = vsel %vm162, %v1119, 0.0
    %1122 = vadd.xlane.f32.xlu0 %v1121
    %v1123 = vpop.xlane.xlu0 %1122
    %v1124 = vsel %vm162, %v1120, 0.0
    %1125 = vadd.xlane.f32.xlu0 %v1124
    %v1126 = vpop.xlane.xlu0 %1125
    %v1127 = vmul.f32 %v1123, %v800
    %v1128 = vmul.f32 %v1126, %v800
    %v1129 = vsub.f32 %v1119, %v1127
    %v1130 = vsub.f32 %v1120, %v1128
    %v1131 = vmul.f32 %v1129, %v1129
    %v1132 = vmul.f32 %v1130, %v1130
    %v1133 = vsel %vm162, %v1131, 0.0
    %1134 = vadd.xlane.f32.xlu0 %v1133
    %v1135 = vpop.xlane.xlu0 %1134
    %v1136 = vsel %vm162, %v1132, 0.0
    %1137 = vadd.xlane.f32.xlu0 %v1136
    %v1138 = vpop.xlane.xlu0 %1137
    %v1139 = vmul.f32 %v1135, %v800
    %v1140 = vmul.f32 %v1138, %v800
    %v1141 = vadd.f32 %v1139, 1e-05
    %v1142 = vadd.f32 %v1140, 1e-05
    %v1143 = vrsqrt.pop %v1141
    %v1144 = vrsqrt.pop %v1142
    %v1145 = vmul.f32 %v1129, %v1143
    %v1146 = vmul.f32 %v1130, %v1144
    %v1147 = vlaneseq
    %v1148 = vshrl.u32 %v1147, 7
    %v1149 = vsub.s32 5, %v1148
    %v1150 = vrot.slane %v54, %v1149
    %v1151 = vmul.f32 %v1145, %v1150
    %v1152 = vmul.f32 %v1146, %v1150
    %v1153 = vlaneseq
    %v1154 = vshrl.u32 %v1153, 7
    %v1155 = vsub.s32 6, %v1154
    %v1156 = vrot.slane %v54, %v1155
    %v1157 = vadd.f32 %v1151, %v1156
    %v1158 = vadd.f32 %v1152, %v1156
    %v1159 = vsel %vm162, %v1157, 0.0
    %v1160 = vrot.slane %v1159, 4
    %v1161 = vadd.f32 %v1159, %v1160
    %v1162 = vrot.slane %v1161, 2
    %v1163 = vadd.f32 %v1161, %v1162
    %v1164 = vrot.slane %v1163, 1
    %v1165 = vadd.f32 %v1163, %v1164
    %v1166 = vsel %vm162, %v1158, 0.0
    %v1167 = vrot.slane %v1166, 4
    %v1168 = vadd.f32 %v1166, %v1167
    %v1169 = vrot.slane %v1168, 2
    %v1170 = vadd.f32 %v1168, %v1169
    %v1171 = vrot.slane %v1170, 1
    %v1172 = vadd.f32 %v1170, %v1171
    %v1173 = vmul.f32 %v1165, 0.125
    %v1174 = vmul.f32 %v1172, 0.125
    %v1175 = vpack.c.bf16 %v1173, %v1173
    %v1176 = vpack.c.bf16 %v1174, %v1174
    %v1177 = vld [vmem:[%s9] sm:$0xf]
    %v1178 = vld [vmem:[%s9 + $0x4] sm:$0xf]
    %v1179 = vld [vmem:[%s9 + $0x8] sm:$0xf]
    %v1180 = vld [vmem:[%s9 + $0xc] sm:$0xf]
    %v1181 = vld [vmem:[%s9 + $0x10] sm:$0xf]
    %v1182 = vld [vmem:[%s9 + $0x14] sm:$0xf]
    %v1183 = vld [vmem:[%s9 + $0x18] sm:$0xf]
    %v1184 = vld [vmem:[%s9 + $0x1c] sm:$0xf]
    %v1185 = vlaneseq
    %v1186 = vshrl.u32 %v1185, 7
    %v1187 = vsub.s32 7, %v1186
    %v1188 = vrot.slane %v54, %v1187
    %v1191 = vunpack.c.l.b16 %v1175
    %v1192 = vunpack.c.l.b16 %v1176
    %vm1193 = vcmask 1041409
    %v1194 = vsel %vm1193, %v1192, %v1191
    %v1195 = vpack.c.b16 %v1194, %v1194
    %v1204 = vunpack.c.l.b16 %v1177
    %v1205 = vunpack.c.l.b16 %v1178
    %v1206 = vunpack.c.l.b16 %v1179
    %v1207 = vunpack.c.l.b16 %v1180
    %v1208 = vunpack.c.l.b16 %v1181
    %v1209 = vunpack.c.l.b16 %v1182
    %v1210 = vunpack.c.l.b16 %v1183
    %v1211 = vunpack.c.l.b16 %v1184
    %v1212 = vpack.c.b16 %v1205, %v1204
    %v1213 = vpack.c.b16 %v1207, %v1206
    %v1214 = vpack.c.b16 %v1209, %v1208
    %v1215 = vpack.c.b16 %v1211, %v1210
    %v1221 = vsel %vm162, %v1195, 0
    %1223 = vmatprep.subr.bf16.mxu0 0
    %1224 = vmatpush1.bf16.msra.mxu0 %v1212
    %1225 = vmatprep.subr.bf16.mxu0 0
    %1226 = vmatpush1.bf16.msra.mxu0 %v1213
    %1227 = vmatprep.subr.bf16.mxu0 0
    %1228 = vmatpush1.bf16.msra.mxu0 %v1214
    %1229 = vmatprep.subr.bf16.mxu0 0
    %1230 = vmatpush1.bf16.msra.mxu0 %v1215
    %1231 = vmatprep.subr.bf16.mxu0 0
    %1232 = vmatpush1.bf16.msra.mxu0 0
    %1233 = vmatprep.subr.bf16.mxu0 0
    %1234 = vmatpush1.bf16.msra.mxu0 0
    %1235 = vmatprep.subr.bf16.mxu0 0
    %1236 = vmatpush1.bf16.msra.mxu0 0
    %1237 = vmatprep.subr.bf16.mxu0 0
    %1238 = vmatpush1.bf16.msra.mxu0 0
    %1239 = vmatprep.subr.bf16.mxu0 0
    %1240 = vmatpush1.bf16.msra.mxu0 0
    %1241 = vmatprep.subr.bf16.mxu0 0
    %1242 = vmatpush1.bf16.msra.mxu0 0
    %1243 = vmatprep.subr.bf16.mxu0 0
    %1244 = vmatpush1.bf16.msra.mxu0 0
    %1245 = vmatprep.subr.bf16.mxu0 0
    %1246 = vmatpush1.bf16.msra.mxu0 0
    %1247 = vmatprep.subr.bf16.mxu0 0
    %1248 = vmatpush1.bf16.msra.mxu0 0
    %1249 = vmatprep.subr.bf16.mxu0 0
    %1250 = vmatpush1.bf16.msra.mxu0 0
    %1251 = vmatprep.subr.bf16.mxu0 0
    %1252 = vmatpush1.bf16.msra.mxu0 0
    %1253 = vmatprep.subr.bf16.mxu0 0
    %1254 = vmatpush1.bf16.msra.mxu0 0
    %1255 = vmatprep.mubr.bf16.mxu0 0
    %1256 = vmatmul.mubr.bf16.gmra.mrb[0].mxu0 %v1221
    %v1257 = vpop.f32.mrb[0].mxu0
    %v1258 = vadd.f32 %v1188, %v1257
    %v1259 = vpop.f32.mrb[0].mxu0
    %v1260 = vpop.f32.mrb[0].mxu0
    %v1261 = vpop.f32.mrb[0].mxu0
    %1262 = vdwg.mxu0
    %v1263 = vmax.f32 %v1258, 0.0
    %v1264 = vpack.c.bf16 %v1263, %v1263
    %v1265 = vld [vmem:[%s10] sm:$0xf]
    %v1266 = vld [vmem:[%s10 + $0x4] sm:$0xf]
    %v1267 = vld [vmem:[%s10 + $0x8] sm:$0xf]
    %v1268 = vld [vmem:[%s10 + $0xc] sm:$0xf]
    %v1269 = vld [vmem:[%s10 + $0x10] sm:$0xf]
    %v1270 = vld [vmem:[%s10 + $0x14] sm:$0xf]
    %v1271 = vld [vmem:[%s10 + $0x18] sm:$0xf]
    %v1272 = vld [vmem:[%s10 + $0x1c] sm:$0xf]
    %v1273 = vlaneseq
    %v1274 = vshrl.u32 %v1273, 7
    %v1275 = vsub.s32 0, %v1274
    %v1276 = vrot.slane %v55, %v1275
    %v1285 = vunpack.c.l.b16 %v1265
    %v1286 = vunpack.c.l.b16 %v1266
    %v1287 = vunpack.c.l.b16 %v1267
    %v1288 = vunpack.c.l.b16 %v1268
    %v1289 = vunpack.c.l.b16 %v1269
    %v1290 = vunpack.c.l.b16 %v1270
    %v1291 = vunpack.c.l.b16 %v1271
    %v1292 = vunpack.c.l.b16 %v1272
    %v1293 = vpack.c.b16 %v1286, %v1285
    %v1294 = vpack.c.b16 %v1288, %v1287
    %v1295 = vpack.c.b16 %v1290, %v1289
    %v1296 = vpack.c.b16 %v1292, %v1291
    %v1302 = vsel %vm162, %v1264, 0
    %1304 = vmatprep.subr.bf16.mxu0 0
    %1305 = vmatpush1.bf16.msra.mxu0 %v1293
    %1306 = vmatprep.subr.bf16.mxu0 0
    %1307 = vmatpush1.bf16.msra.mxu0 %v1294
    %1308 = vmatprep.subr.bf16.mxu0 0
    %1309 = vmatpush1.bf16.msra.mxu0 %v1295
    %1310 = vmatprep.subr.bf16.mxu0 0
    %1311 = vmatpush1.bf16.msra.mxu0 %v1296
    %1312 = vmatprep.subr.bf16.mxu0 0
    %1313 = vmatpush1.bf16.msra.mxu0 0
    %1314 = vmatprep.subr.bf16.mxu0 0
    %1315 = vmatpush1.bf16.msra.mxu0 0
    %1316 = vmatprep.subr.bf16.mxu0 0
    %1317 = vmatpush1.bf16.msra.mxu0 0
    %1318 = vmatprep.subr.bf16.mxu0 0
    %1319 = vmatpush1.bf16.msra.mxu0 0
    %1320 = vmatprep.subr.bf16.mxu0 0
    %1321 = vmatpush1.bf16.msra.mxu0 0
    %1322 = vmatprep.subr.bf16.mxu0 0
    %1323 = vmatpush1.bf16.msra.mxu0 0
    %1324 = vmatprep.subr.bf16.mxu0 0
    %1325 = vmatpush1.bf16.msra.mxu0 0
    %1326 = vmatprep.subr.bf16.mxu0 0
    %1327 = vmatpush1.bf16.msra.mxu0 0
    %1328 = vmatprep.subr.bf16.mxu0 0
    %1329 = vmatpush1.bf16.msra.mxu0 0
    %1330 = vmatprep.subr.bf16.mxu0 0
    %1331 = vmatpush1.bf16.msra.mxu0 0
    %1332 = vmatprep.subr.bf16.mxu0 0
    %1333 = vmatpush1.bf16.msra.mxu0 0
    %1334 = vmatprep.subr.bf16.mxu0 0
    %1335 = vmatpush1.bf16.msra.mxu0 0
    %1336 = vmatprep.mubr.bf16.mxu0 0
    %1337 = vmatmul.mubr.bf16.gmra.mrb[0].mxu0 %v1302
    %v1338 = vpop.f32.mrb[0].mxu0
    %v1339 = vadd.f32 %v1276, %v1338
    %v1340 = vpop.f32.mrb[0].mxu0
    %v1341 = vpop.f32.mrb[0].mxu0
    %v1342 = vpop.f32.mrb[0].mxu0
    %1343 = vdwg.mxu0
    %v1344 = vxor.u32 %v1339, 2147483648
    %v1345 = vmul.f32 %v1344, 1.442695
    %v1346 = vpow.pop %v1345
    %v1347 = vadd.f32 %v1346, 1.0
    %v1348 = vrcp.pop %v1347
    %v1349 = vmul.f32 1.0, %v1348
    %1350 = vst [vmem:[%s12] sm:$0x3] %v1349
    // Predicated region
    $region54: #{transformer_forward.1} parent=1 // pred_check
      _
    $region55: #{transformer_forward.1} parent=1 // pred_check_branch
      %1352 = sbr.rel (0) target = $region57
    $region56: #{transformer_forward.1} parent=1 // pred_region
      _
    $region57: #{transformer_forward.1} parent=1 // pred_fallthru
      _
    // Predicated region
    $region58: #{transformer_forward.1} parent=1 // pred_check
      _
    $region59: #{transformer_forward.1} parent=1 // pred_check_branch
      %1354 = sbr.rel (0) target = $region61
    $region60: #{transformer_forward.1} parent=1 // pred_region
      _
    $region61: #{transformer_forward.1} parent=1 // pred_fallthru
      _
    %1355 = vsyncpa [#allocation3], 1

</llo_original>
